<compile_context>
chip_gen: v5e
topology: v5e:2x2
jax: 0.10.0
libtpu: 0.0.40
codegen_flags: <defaults>
</compile_context>

<pallas_src>
import functools
import math

import jax
import jax.numpy as jnp
from jax import lax
from jax.experimental import pallas as pl
from jax.experimental.pallas import tpu as pltpu


def _round_up(x, m):
    return (x + m - 1) // m * m


# ----------------------------------------------------------------------------
# Tiled linear:  y = x @ w_nk.T + b     (w_nk in PyTorch (out, in) layout)
# ----------------------------------------------------------------------------
def _linear_kernel(x_ref, w_ref, b_ref, o_ref, acc_ref):
    k = pl.program_id(2)

    @pl.when(k == 0)
    def _init():
        acc_ref[...] = jnp.zeros_like(acc_ref)

    # Contract the K axis of both operands: RHS stays in (N, K) layout, the MXU
    # handles the transposed operand without any materialized w.T copy.
    acc_ref[...] += lax.dot_general(
        x_ref[...], w_ref[...],
        dimension_numbers=(((1,), (1,)), ((), ())),
        preferred_element_type=jnp.float32)

    @pl.when(k == pl.num_programs(2) - 1)
    def _finalize():
        o_ref[...] = (acc_ref[...] + b_ref[...]).astype(o_ref.dtype)


def pallas_linear(x, w_nk, b, *, tm=256, tn=256, tk=512):
    """x: (M, K), w_nk: (N, K), b: (N,) -> (M, N).

    Tiled (tm, tn, tk) matmul with an f32 VMEM accumulator; K is the innermost
    ("arbitrary") axis, M/N are "parallel" (sharded across the 2 TCs on v7x).
    Defaults target v6e/v7x; on v5e prefer tm=tn=128 (4x128^2 MXU).
    """
    M, K = x.shape
    N, K2 = w_nk.shape
    assert K == K2 and b.shape == (N,)

    # Clamp tiles for small problems while respecting the (8, 128) tiling rule.
    tm = min(tm, _round_up(M, 8))
    tn = min(tn, _round_up(N, 128))
    tk = min(tk, _round_up(K, 128))

    Mp, Np, Kp = _round_up(M, tm), _round_up(N, tn), _round_up(K, tk)
    xp = x if (Mp == M and Kp == K) else jnp.pad(x, ((0, Mp - M), (0, Kp - K)))
    wp = w_nk if (Np == N and Kp == K) else jnp.pad(w_nk, ((0, Np - N), (0, Kp - K)))
    bp = (b if Np == N else jnp.pad(b, (0, Np - N))).reshape(1, Np)

    grid = (Mp // tm, Np // tn, Kp // tk)

    out = pl.pallas_call(
        _linear_kernel,
        out_shape=jax.ShapeDtypeStruct((Mp, Np), x.dtype),
        grid_spec=pltpu.PrefetchScalarGridSpec(
            num_scalar_prefetch=0,
            grid=grid,
            in_specs=[
                pl.BlockSpec((tm, tk), lambda i, j, k: (i, k)),
                pl.BlockSpec((tn, tk), lambda i, j, k: (j, k)),
                pl.BlockSpec((1, tn), lambda i, j, k: (0, j)),
            ],
            out_specs=pl.BlockSpec((tm, tn), lambda i, j, k: (i, j)),
            scratch_shapes=[pltpu.VMEM((tm, tn), jnp.float32)],
        ),
        compiler_params=pltpu.CompilerParams(
            dimension_semantics=("parallel", "parallel", "arbitrary"),
            # 256x512 + 256x512 f32 inputs double-buffered + 256x256 out/acc
            # ~= 3 MiB: comfortably inside v7x's 64 MiB VMEM; set explicitly so
            # the compiler never silently drops pipeline depth.
            vmem_limit_bytes=32 * 1024 * 1024,
        ),
    )(xp, wp, bp)

    return out if (Mp == M and Np == N) else out[:M, :N]


# ----------------------------------------------------------------------------
# Memory augmentation:  hidden[s, b, :] = x[s, b, :] + memory[s, :]
# ----------------------------------------------------------------------------
def _memory_add_kernel(x_ref, m_ref, o_ref):
    # x_ref: (ts, B, E), m_ref: (ts, E) broadcast over the batch dim.
    o_ref[...] = x_ref[...] + m_ref[...][:, None, :]


def pallas_memory_add(x, memory):
    """x: (S, B, E) embedded inputs, memory: (S, E) -> x + memory (as in the module)."""
    S, B, E = x.shape
    assert memory.shape == (S, E), "memory_size must equal the sequence length"
    ts = S
    for cand in (256, 128, 64, 32, 16, 8):
        if S % cand == 0:
            ts = cand
            break
    return pl.pallas_call(
        _memory_add_kernel,
        out_shape=jax.ShapeDtypeStruct((S, B, E), x.dtype),
        grid=(S // ts,),
        in_specs=[
            pl.BlockSpec((ts, B, E), lambda i: (i, 0, 0)),
            pl.BlockSpec((ts, E), lambda i: (i, 0)),
        ],
        out_specs=pl.BlockSpec((ts, B, E), lambda i: (i, 0, 0)),
        compiler_params=pltpu.CompilerParams(dimension_semantics=("parallel",)),
    )(x, memory)


# ----------------------------------------------------------------------------
# Multi-head self-attention on the fused QKV activation (no layout transposes)
# ----------------------------------------------------------------------------
def _mha_attn_kernel(q_ref, k_ref, v_ref, o_ref, *, scale, b_block, h_block):
    # q/k/v_ref: (S, Bblk, Hblk, Dh) slabs gathered by BlockSpec index_maps.
    # o_ref:     (S, Bblk, Hblk * Dh)  -- lane-dense output slab.
    for b in range(b_block):
        head_out = []
        for h in range(h_block):
            q = q_ref[:, b, h, :].astype(jnp.float32) * scale   # scale folded into q
            k = k_ref[:, b, h, :].astype(jnp.float32)
            v = v_ref[:, b, h, :]
            s = lax.dot_general(                                 # (S, S) scores
                q, k, dimension_numbers=(((1,), (1,)), ((), ())),
                preferred_element_type=jnp.float32)
            m = jnp.max(s, axis=-1, keepdims=True)
            p = jnp.exp(s - m)
            denom = jnp.sum(p, axis=-1, keepdims=True)
            probs = p * pl.reciprocal(denom, approx=True)        # EUP, frees VALU
            # TODO(synk): attention-weight dropout (p=0.1) omitted (eval mode).
            o = jnp.dot(probs.astype(v.dtype), v,
                        preferred_element_type=jnp.float32)      # (S, Dh)
            head_out.append(o.astype(o_ref.dtype))
        # One lane-dense (S, Hblk*Dh) store per batch row of the block.
        o_ref[:, b, :] = jnp.concatenate(head_out, axis=-1)


def pallas_mha_self_attention(qkv, *, nhead, b_block=None, h_block=None):
    """qkv: (S, B, 3, H, Dh) fused-projection output -> (S, B, E) attention output."""
    S, B, three, H, Dh = qkv.shape
    assert three == 3 and H == nhead
    E = H * Dh
    scale = 1.0 / math.sqrt(Dh)

    # Multiple (batch, head) pairs per grid step to amortize per-step overhead.
    if b_block is None:
        b_block = B if (B <= 8 or B % 8 != 0) else 8
    if h_block is None:
        h_block = H
    assert B % b_block == 0 and H % h_block == 0
    assert b_block == B or b_block % 8 == 0            # (8,128) rule on the out block
    assert h_block == H or (h_block * Dh) % 128 == 0   # lane-dense stored slab

    def qkv_spec(sel):
        return pl.BlockSpec(
            (S, b_block, pl.Squeezed(), h_block, Dh),
            lambda bi, hi, sel=sel: (0, bi, sel, hi, 0))

    kern = functools.partial(_mha_attn_kernel, scale=scale,
                             b_block=b_block, h_block=h_block)
    return pl.pallas_call(
        kern,
        out_shape=jax.ShapeDtypeStruct((S, B, E), qkv.dtype),
        grid=(B // b_block, H // h_block),
        in_specs=[qkv_spec(0), qkv_spec(1), qkv_spec(2)],
        out_specs=pl.BlockSpec((S, b_block, h_block * Dh),
                               lambda bi, hi: (0, bi, hi)),
        compiler_params=pltpu.CompilerParams(
            dimension_semantics=("parallel", "parallel"),
            vmem_limit_bytes=32 * 1024 * 1024,
        ),
    )(qkv, qkv, qkv)


# ----------------------------------------------------------------------------
# Wrappers
# ----------------------------------------------------------------------------
def multihead_self_attention_forward(x, params, nhead):
    """x: (S, B, E) -> (S, B, E).  nn.MultiheadAttention(E, nhead)(x, x, x)[0], eval."""
    S, B, E = x.shape
    H = nhead
    Dh = E // H

    w_in = params["in_proj_weight"]      # (3E, E) PyTorch layout, used directly
    b_in = params["in_proj_bias"]        # (3E,)
    w_out = params["out_proj_weight"]    # (E, E)
    b_out = params["out_proj_bias"]      # (E,)

    # Fused QKV projection; (S*B, 3E) -> (S, B, 3, H, Dh) is a contiguous reshape.
    qkv = pallas_linear(x.reshape(S * B, E), w_in, b_in)
    qkv = qkv.reshape(S, B, 3, H, Dh)

    # Attention output already lands in (S, B, E) layout (no transposes).
    attn = pallas_mha_self_attention(qkv, nhead=H)

    out = pallas_linear(attn.reshape(S * B, E), w_out, b_out)
    return out.reshape(S, B, E)


def memory_augmented_ctr_forward(x_embedded, params, nhead):
    """Pallas forward of MemoryAugmentedCTRTransformer's hot path.

    x_embedded: (S, B, E) = base_model.embeddings(x); memory: (S, E).
    """
    h = pallas_memory_add(x_embedded, params["memory"])        # + self.memory
    return multihead_self_attention_forward(h, params, nhead)  # base_model hot path


# ----------------------------------------------------------------------------
# Deterministic parameter init
# ----------------------------------------------------------------------------
def init_params(key, d_model, seq_len):
    k1, k2, k3, k4 = jax.random.split(key, 4)
    bound = 1.0 / math.sqrt(d_model)
    return {
        "memory": jax.random.normal(k4, (seq_len, d_model), jnp.float32),
        "in_proj_weight": jax.random.uniform(
            k1, (3 * d_model, d_model), jnp.float32, -bound, bound),
        "in_proj_bias": jnp.zeros((3 * d_model,), jnp.float32),
        "out_proj_weight": jax.random.uniform(
            k2, (d_model, d_model), jnp.float32, -bound, bound),
        "out_proj_bias": jax.random.uniform(
            k3, (d_model,), jnp.float32, -bound, bound),
    }


if __name__ == "__main__":
    # Small shapes: seq (= memory_size) = 8, batch = 2, hidden = 32, heads = 4
    S, B, E, H = 8, 2, 32, 4

    key = jax.random.PRNGKey(0)
    kx, kp = jax.random.split(key)
    x = jax.random.normal(kx, (S, B, E), jnp.float32)   # stand-in for embeddings(x)
    params = init_params(kp, E, S)

    fwd = jax.jit(functools.partial(memory_augmented_ctr_forward, nhead=H))
    out = fwd(x, params)
    jax.block_until_ready(out)
    assert out.shape == (S, B, E)

    # Pure-JAX reference of the same math (eval-mode MHA on memory-augmented input).
    def ref_forward(x, p):
        h = x + p["memory"][:, None, :]
        qkv = h.reshape(S * B, E) @ p["in_proj_weight"].T + p["in_proj_bias"]
        q, k, v = jnp.split(qkv, 3, axis=-1)

        def heads(t):
            return t.reshape(S, B, H, E // H).transpose(1, 2, 0, 3)

        qh, kh, vh = heads(q), heads(k), heads(v)
        s = jnp.einsum("bhqd,bhkd->bhqk", qh, kh) / math.sqrt(E // H)
        pr = jax.nn.softmax(s, axis=-1)
        o = jnp.einsum("bhqk,bhkd->bhqd", pr, vh)
        o = o.transpose(2, 0, 1, 3).reshape(S * B, E)
        return (o @ p["out_proj_weight"].T + p["out_proj_bias"]).reshape(S, B, E)

    ref = ref_forward(x, params)
    # Slightly loose tolerance: pl.reciprocal(approx=True) in the softmax denom.
    assert jnp.allclose(out, ref, atol=2e-3, rtol=2e-3), "mismatch vs reference"

    print("KERNEL_OK")
</pallas_src>

<mosaic_0001>
module attributes {stable_mosaic.version = 11 : i64} {
  func.func @_memory_add_kernel(%arg0: i32, %arg1: memref<8x2x32xf32, #tpu.memory_space<vmem>>, %arg2: memref<8x32xf32, #tpu.memory_space<vmem>>, %arg3: memref<8x2x32xf32, #tpu.memory_space<vmem>>) attributes {dimension_semantics = [#tpu.dimension_semantics<parallel>], iteration_bounds = array<i64: 1>, scalar_prefetch = 0 : i64, scratch_operands = 0 : i64, tpu.core_type = #tpu.core_type<tc>, window_params = [{transform_indices = @transform_0, window_bounds = array<i64: 8, 2, 32>}, {transform_indices = @transform_1, window_bounds = array<i64: 8, 32>}, {transform_indices = @transform_2, window_bounds = array<i64: 8, 2, 32>}]} {
    %c0 = arith.constant 0 : index
    %c0_0 = arith.constant 0 : index
    %c0_1 = arith.constant 0 : index
    %0 = vector.load %arg1[%c0, %c0_0, %c0_1] : memref<8x2x32xf32, #tpu.memory_space<vmem>>, vector<8x2x32xf32>
    %c0_2 = arith.constant 0 : index
    %c0_3 = arith.constant 0 : index
    %1 = vector.load %arg2[%c0_2, %c0_3] : memref<8x32xf32, #tpu.memory_space<vmem>>, vector<8x32xf32>
    %2 = vector.shape_cast %1 : vector<8x32xf32> to vector<8x1x32xf32>
    %3 = vector.broadcast %2 : vector<8x1x32xf32> to vector<8x2x32xf32>
    %4 = arith.addf %0, %3 : vector<8x2x32xf32>
    %c0_4 = arith.constant 0 : index
    %c0_5 = arith.constant 0 : index
    %c0_6 = arith.constant 0 : index
    %5 = vector.load %arg3[%c0_4, %c0_5, %c0_6] : memref<8x2x32xf32, #tpu.memory_space<vmem>>, vector<8x2x32xf32>
    tpu.vector_store %arg3[%c0_4, %c0_5, %c0_6], %4 {strides = array<i32>} : memref<8x2x32xf32, #tpu.memory_space<vmem>>, vector<8x2x32xf32>,
    return
  }
  func.func @transform_0(%arg0: i32) -> (i32, i32, i32) {
    %c0_i32 = arith.constant 0 : i32
    %c0_i32_0 = arith.constant 0 : i32
    %c0_i32_1 = arith.constant 0 : i32
    return %arg0, %c0_i32, %c0_i32_0 : i32, i32, i32
  }
  func.func @transform_1(%arg0: i32) -> (i32, i32) {
    %c0_i32 = arith.constant 0 : i32
    %c0_i32_0 = arith.constant 0 : i32
    return %arg0, %c0_i32 : i32, i32
  }
  func.func @transform_2(%arg0: i32) -> (i32, i32, i32) {
    %c0_i32 = arith.constant 0 : i32
    %c0_i32_0 = arith.constant 0 : i32
    %c0_i32_1 = arith.constant 0 : i32
    return %arg0, %c0_i32, %c0_i32_0 : i32, i32, i32
  }
}

module attributes {stable_mosaic.version = 11 : i64} {
  func.func @_linear_kernel(%arg0: i32, %arg1: i32, %arg2: i32, %arg3: memref<16x128xf32, #tpu.memory_space<vmem>>, %arg4: memref<128x128xf32, #tpu.memory_space<vmem>>, %arg5: memref<1x128xf32, #tpu.memory_space<vmem>>, %arg6: memref<16x128xf32, #tpu.memory_space<vmem>>, %arg7: memref<16x128xf32, #tpu.memory_space<vmem>>) attributes {dimension_semantics = [#tpu.dimension_semantics<parallel>, #tpu.dimension_semantics<parallel>, #tpu.dimension_semantics<arbitrary>], iteration_bounds = array<i64: 1, 1, 1>, scalar_prefetch = 0 : i64, scratch_operands = 1 : i64, tpu.core_type = #tpu.core_type<tc>, window_params = [{transform_indices = @transform_0, window_bounds = array<i64: 16, 128>}, {transform_indices = @transform_1, window_bounds = array<i64: 128, 128>}, {transform_indices = @transform_2, window_bounds = array<i64: 1, 128>}, {transform_indices = @transform_3, window_bounds = array<i64: 16, 128>}]} {
    %c0_i32 = arith.constant 0 : i32
    %0 = arith.cmpi eq, %arg2, %c0_i32 : i32
    %1 = arith.extui %0 : i1 to i32
    %c0_i32_0 = arith.constant 0 : i32
    %2 = arith.cmpi ne, %1, %c0_i32_0 : i32
    scf.if %2 {
      %cst_10 = arith.constant 0.000000e+00 : f32
      %12 = vector.broadcast %cst_10 : f32 to vector<16x128xf32>
      %c0_11 = arith.constant 0 : index
      %c0_12 = arith.constant 0 : index
      %13 = vector.load %arg7[%c0_11, %c0_12] : memref<16x128xf32, #tpu.memory_space<vmem>>, vector<16x128xf32>
      tpu.vector_store %arg7[%c0_11, %c0_12], %12 {strides = array<i32>} : memref<16x128xf32, #tpu.memory_space<vmem>>, vector<16x128xf32>,
    } else {
    }
    %c0 = arith.constant 0 : index
    %c0_1 = arith.constant 0 : index
    %3 = vector.load %arg7[%c0, %c0_1] : memref<16x128xf32, #tpu.memory_space<vmem>>, vector<16x128xf32>
    %c0_2 = arith.constant 0 : index
    %c0_3 = arith.constant 0 : index
    %4 = vector.load %arg3[%c0_2, %c0_3] : memref<16x128xf32, #tpu.memory_space<vmem>>, vector<16x128xf32>
    %c0_4 = arith.constant 0 : index
    %c0_5 = arith.constant 0 : index
    %5 = vector.load %arg4[%c0_4, %c0_5] : memref<128x128xf32, #tpu.memory_space<vmem>>, vector<128x128xf32>
    %cst = arith.constant dense<0.000000e+00> : vector<16x128xf32>
    %6 = tpu.matmul %4, %5, %cst {dimension_numbers = #tpu.dot_dimension_numbers<[1], [1], [0], [0], [0, 0, 1, 0], [], []>} : vector<16x128xf32>, vector<128x128xf32>, vector<16x128xf32> -> vector<16x128xf32>
    %7 = arith.addf %3, %6 : vector<16x128xf32>
    %c0_6 = arith.constant 0 : index
    %c0_7 = arith.constant 0 : index
    %8 = vector.load %arg7[%c0_6, %c0_7] : memref<16x128xf32, #tpu.memory_space<vmem>>, vector<16x128xf32>
    tpu.vector_store %arg7[%c0_6, %c0_7], %7 {strides = array<i32>} : memref<16x128xf32, #tpu.memory_space<vmem>>, vector<16x128xf32>,
    %c0_i32_8 = arith.constant 0 : i32
    %9 = arith.cmpi eq, %arg2, %c0_i32_8 : i32
    %10 = arith.extui %9 : i1 to i32
    %c0_i32_9 = arith.constant 0 : i32
    %11 = arith.cmpi ne, %10, %c0_i32_9 : i32
    scf.if %11 {
      %c0_10 = arith.constant 0 : index
      %c0_11 = arith.constant 0 : index
      %12 = vector.load %arg7[%c0_10, %c0_11] : memref<16x128xf32, #tpu.memory_space<vmem>>, vector<16x128xf32>
      %c0_12 = arith.constant 0 : index
      %c0_13 = arith.constant 0 : index
      %13 = vector.load %arg5[%c0_12, %c0_13] : memref<1x128xf32, #tpu.memory_space<vmem>>, vector<1x128xf32>
      %14 = vector.broadcast %13 : vector<1x128xf32> to vector<16x128xf32>
      %15 = arith.addf %12, %14 : vector<16x128xf32>
      %c0_14 = arith.constant 0 : index
      %c0_15 = arith.constant 0 : index
      %16 = vector.load %arg6[%c0_14, %c0_15] : memref<16x128xf32, #tpu.memory_space<vmem>>, vector<16x128xf32>
      tpu.vector_store %arg6[%c0_14, %c0_15], %15 {strides = array<i32>} : memref<16x128xf32, #tpu.memory_space<vmem>>, vector<16x128xf32>,
    } else {
    }
    return
  }
  func.func @transform_0(%arg0: i32, %arg1: i32, %arg2: i32) -> (i32, i32) {
    %c0_i32 = arith.constant 0 : i32
    return %arg0, %arg2 : i32, i32
  }
  func.func @transform_1(%arg0: i32, %arg1: i32, %arg2: i32) -> (i32, i32) {
    %c0_i32 = arith.constant 0 : i32
    return %arg1, %arg2 : i32, i32
  }
  func.func @transform_2(%arg0: i32, %arg1: i32, %arg2: i32) -> (i32, i32) {
    %c0_i32 = arith.constant 0 : i32
    %c0_i32_0 = arith.constant 0 : i32
    return %c0_i32, %arg1 : i32, i32
  }
  func.func @transform_3(%arg0: i32, %arg1: i32, %arg2: i32) -> (i32, i32) {
    %c0_i32 = arith.constant 0 : i32
    return %arg0, %arg1 : i32, i32
  }
}

module attributes {stable_mosaic.version = 11 : i64} {
  func.func @_mha_attn_kernel(%arg0: i32, %arg1: i32, %arg2: memref<8x2x1x4x8xf32, #tpu.memory_space<vmem>>, %arg3: memref<8x2x1x4x8xf32, #tpu.memory_space<vmem>>, %arg4: memref<8x2x1x4x8xf32, #tpu.memory_space<vmem>>, %arg5: memref<8x2x32xf32, #tpu.memory_space<vmem>>) attributes {dimension_semantics = [#tpu.dimension_semantics<parallel>, #tpu.dimension_semantics<parallel>], iteration_bounds = array<i64: 1, 1>, scalar_prefetch = 0 : i64, scratch_operands = 0 : i64, tpu.core_type = #tpu.core_type<tc>, window_params = [{transform_indices = @transform_0, window_bounds = array<i64: 8, 2, 1, 4, 8>}, {transform_indices = @transform_1, window_bounds = array<i64: 8, 2, 1, 4, 8>}, {transform_indices = @transform_2, window_bounds = array<i64: 8, 2, 1, 4, 8>}, {transform_indices = @transform_3, window_bounds = array<i64: 8, 2, 32>}]} {
    %c0 = arith.constant 0 : index
    %c0_0 = arith.constant 0 : index
    %c0_1 = arith.constant 0 : index
    %c0_2 = arith.constant 0 : index
    %c0_3 = arith.constant 0 : index
    %0 = vector.load %arg2[%c0, %c0_0, %c0_1, %c0_2, %c0_3] : memref<8x2x1x4x8xf32, #tpu.memory_space<vmem>>, vector<8x1x1x1x8xf32>
    %1 = vector.shape_cast %0 : vector<8x1x1x1x8xf32> to vector<8x8xf32>
    %cst = arith.constant 0.353553385 : f32
    %2 = vector.broadcast %cst : f32 to vector<8x8xf32>
    %3 = arith.mulf %1, %2 : vector<8x8xf32>
    %c0_4 = arith.constant 0 : index
    %c0_5 = arith.constant 0 : index
    %c0_6 = arith.constant 0 : index
    %c0_7 = arith.constant 0 : index
    %c0_8 = arith.constant 0 : index
    %4 = vector.load %arg3[%c0_4, %c0_5, %c0_6, %c0_7, %c0_8] : memref<8x2x1x4x8xf32, #tpu.memory_space<vmem>>, vector<8x1x1x1x8xf32>
    %5 = vector.shape_cast %4 : vector<8x1x1x1x8xf32> to vector<8x8xf32>
    %c0_9 = arith.constant 0 : index
    %c0_10 = arith.constant 0 : index
    %c0_11 = arith.constant 0 : index
    %c0_12 = arith.constant 0 : index
    %c0_13 = arith.constant 0 : index
    %6 = vector.load %arg4[%c0_9, %c0_10, %c0_11, %c0_12, %c0_13] : memref<8x2x1x4x8xf32, #tpu.memory_space<vmem>>, vector<8x1x1x1x8xf32>
    %7 = vector.shape_cast %6 : vector<8x1x1x1x8xf32> to vector<8x8xf32>
    %cst_14 = arith.constant dense<0.000000e+00> : vector<8x8xf32>
    %8 = tpu.matmul %3, %5, %cst_14 {dimension_numbers = #tpu.dot_dimension_numbers<[1], [1], [0], [0], [0, 0, 1, 0], [], []>} : vector<8x8xf32>, vector<8x8xf32>, vector<8x8xf32> -> vector<8x8xf32>
    %cst_15 = arith.constant dense<0xFF800000> : vector<8xf32>
    %9 = vector.multi_reduction <maximumf>, %8, %cst_15 [1] : vector<8x8xf32> to vector<8xf32>
    %10 = vector.shape_cast %9 : vector<8xf32> to vector<8x1xf32>
    %11 = vector.broadcast %10 : vector<8x1xf32> to vector<8x8xf32>
    %12 = arith.subf %8, %11 : vector<8x8xf32>
    %13 = math.exp %12 : vector<8x8xf32>
    %cst_16 = arith.constant dense<0.000000e+00> : vector<8xf32>
    %14 = vector.multi_reduction <add>, %13, %cst_16 [1] : vector<8x8xf32> to vector<8xf32>
    %15 = vector.shape_cast %14 : vector<8xf32> to vector<8x1xf32>
    %16 = tpu.reciprocal %15 {approx = true} : vector<8x1xf32> -> vector<8x1xf32>
    %17 = vector.broadcast %16 : vector<8x1xf32> to vector<8x8xf32>
    %18 = arith.mulf %13, %17 : vector<8x8xf32>
    %cst_17 = arith.constant dense<0.000000e+00> : vector<8x8xf32>
    %19 = tpu.matmul %18, %7, %cst_17 {dimension_numbers = #tpu.dot_dimension_numbers<[1], [0], [0], [1], [0, 0, 1, 1], [], []>} : vector<8x8xf32>, vector<8x8xf32>, vector<8x8xf32> -> vector<8x8xf32>
    %c0_18 = arith.constant 0 : index
    %c0_19 = arith.constant 0 : index
    %c0_20 = arith.constant 0 : index
    %c1 = arith.constant 1 : index
    %c0_21 = arith.constant 0 : index
    %20 = vector.load %arg2[%c0_18, %c0_19, %c0_20, %c1, %c0_21] : memref<8x2x1x4x8xf32, #tpu.memory_space<vmem>>, vector<8x1x1x1x8xf32>
    %21 = vector.shape_cast %20 : vector<8x1x1x1x8xf32> to vector<8x8xf32>
    %cst_22 = arith.constant 0.353553385 : f32
    %22 = vector.broadcast %cst_22 : f32 to vector<8x8xf32>
    %23 = arith.mulf %21, %22 : vector<8x8xf32>
    %c0_23 = arith.constant 0 : index
    %c0_24 = arith.constant 0 : index
    %c0_25 = arith.constant 0 : index
    %c1_26 = arith.constant 1 : index
    %c0_27 = arith.constant 0 : index
    %24 = vector.load %arg3[%c0_23, %c0_24, %c0_25, %c1_26, %c0_27] : memref<8x2x1x4x8xf32, #tpu.memory_space<vmem>>, vector<8x1x1x1x8xf32>
    %25 = vector.shape_cast %24 : vector<8x1x1x1x8xf32> to vector<8x8xf32>
    %c0_28 = arith.constant 0 : index
    %c0_29 = arith.constant 0 : index
    %c0_30 = arith.constant 0 : index
    %c1_31 = arith.constant 1 : index
    %c0_32 = arith.constant 0 : index
    %26 = vector.load %arg4[%c0_28, %c0_29, %c0_30, %c1_31, %c0_32] : memref<8x2x1x4x8xf32, #tpu.memory_space<vmem>>, vector<8x1x1x1x8xf32>
    %27 = vector.shape_cast %26 : vector<8x1x1x1x8xf32> to vector<8x8xf32>
    %cst_33 = arith.constant dense<0.000000e+00> : vector<8x8xf32>
    %28 = tpu.matmul %23, %25, %cst_33 {dimension_numbers = #tpu.dot_dimension_numbers<[1], [1], [0], [0], [0, 0, 1, 0], [], []>} : vector<8x8xf32>, vector<8x8xf32>, vector<8x8xf32> -> vector<8x8xf32>
    %cst_34 = arith.constant dense<0xFF800000> : vector<8xf32>
    %29 = vector.multi_reduction <maximumf>, %28, %cst_34 [1] : vector<8x8xf32> to vector<8xf32>
    %30 = vector.shape_cast %29 : vector<8xf32> to vector<8x1xf32>
    %31 = vector.broadcast %30 : vector<8x1xf32> to vector<8x8xf32>
    %32 = arith.subf %28, %31 : vector<8x8xf32>
    %33 = math.exp %32 : vector<8x8xf32>
    %cst_35 = arith.constant dense<0.000000e+00> : vector<8xf32>
    %34 = vector.multi_reduction <add>, %33, %cst_35 [1] : vector<8x8xf32> to vector<8xf32>
    %35 = vector.shape_cast %34 : vector<8xf32> to vector<8x1xf32>
    %36 = tpu.reciprocal %35 {approx = true} : vector<8x1xf32> -> vector<8x1xf32>
    %37 = vector.broadcast %36 : vector<8x1xf32> to vector<8x8xf32>
    %38 = arith.mulf %33, %37 : vector<8x8xf32>
    %cst_36 = arith.constant dense<0.000000e+00> : vector<8x8xf32>
    %39 = tpu.matmul %38, %27, %cst_36 {dimension_numbers = #tpu.dot_dimension_numbers<[1], [0], [0], [1], [0, 0, 1, 1], [], []>} : vector<8x8xf32>, vector<8x8xf32>, vector<8x8xf32> -> vector<8x8xf32>
    %c0_37 = arith.constant 0 : index
    %c0_38 = arith.constant 0 : index
    %c0_39 = arith.constant 0 : index
    %c2 = arith.constant 2 : index
    %c0_40 = arith.constant 0 : index
    %40 = vector.load %arg2[%c0_37, %c0_38, %c0_39, %c2, %c0_40] : memref<8x2x1x4x8xf32, #tpu.memory_space<vmem>>, vector<8x1x1x1x8xf32>
    %41 = vector.shape_cast %40 : vector<8x1x1x1x8xf32> to vector<8x8xf32>
    %cst_41 = arith.constant 0.353553385 : f32
    %42 = vector.broadcast %cst_41 : f32 to vector<8x8xf32>
    %43 = arith.mulf %41, %42 : vector<8x8xf32>
    %c0_42 = arith.constant 0 : index
    %c0_43 = arith.constant 0 : index
    %c0_44 = arith.constant 0 : index
    %c2_45 = arith.constant 2 : index
    %c0_46 = arith.constant 0 : index
    %44 = vector.load %arg3[%c0_42, %c0_43, %c0_44, %c2_45, %c0_46] : memref<8x2x1x4x8xf32, #tpu.memory_space<vmem>>, vector<8x1x1x1x8xf32>
    %45 = vector.shape_cast %44 : vector<8x1x1x1x8xf32> to vector<8x8xf32>
    %c0_47 = arith.constant 0 : index
    %c0_48 = arith.constant 0 : index
    %c0_49 = arith.constant 0 : index
    %c2_50 = arith.constant 2 : index
    %c0_51 = arith.constant 0 : index
    %46 = vector.load %arg4[%c0_47, %c0_48, %c0_49, %c2_50, %c0_51] : memref<8x2x1x4x8xf32, #tpu.memory_space<vmem>>, vector<8x1x1x1x8xf32>
    %47 = vector.shape_cast %46 : vector<8x1x1x1x8xf32> to vector<8x8xf32>
    %cst_52 = arith.constant dense<0.000000e+00> : vector<8x8xf32>
    %48 = tpu.matmul %43, %45, %cst_52 {dimension_numbers = #tpu.dot_dimension_numbers<[1], [1], [0], [0], [0, 0, 1, 0], [], []>} : vector<8x8xf32>, vector<8x8xf32>, vector<8x8xf32> -> vector<8x8xf32>
    %cst_53 = arith.constant dense<0xFF800000> : vector<8xf32>
    %49 = vector.multi_reduction <maximumf>, %48, %cst_53 [1] : vector<8x8xf32> to vector<8xf32>
    %50 = vector.shape_cast %49 : vector<8xf32> to vector<8x1xf32>
    %51 = vector.broadcast %50 : vector<8x1xf32> to vector<8x8xf32>
    %52 = arith.subf %48, %51 : vector<8x8xf32>
    %53 = math.exp %52 : vector<8x8xf32>
    %cst_54 = arith.constant dense<0.000000e+00> : vector<8xf32>
    %54 = vector.multi_reduction <add>, %53, %cst_54 [1] : vector<8x8xf32> to vector<8xf32>
    %55 = vector.shape_cast %54 : vector<8xf32> to vector<8x1xf32>
    %56 = tpu.reciprocal %55 {approx = true} : vector<8x1xf32> -> vector<8x1xf32>
    %57 = vector.broadcast %56 : vector<8x1xf32> to vector<8x8xf32>
    %58 = arith.mulf %53, %57 : vector<8x8xf32>
    %cst_55 = arith.constant dense<0.000000e+00> : vector<8x8xf32>
    %59 = tpu.matmul %58, %47, %cst_55 {dimension_numbers = #tpu.dot_dimension_numbers<[1], [0], [0], [1], [0, 0, 1, 1], [], []>} : vector<8x8xf32>, vector<8x8xf32>, vector<8x8xf32> -> vector<8x8xf32>
    %c0_56 = arith.constant 0 : index
    %c0_57 = arith.constant 0 : index
    %c0_58 = arith.constant 0 : index
    %c3 = arith.constant 3 : index
    %c0_59 = arith.constant 0 : index
    %60 = vector.load %arg2[%c0_56, %c0_57, %c0_58, %c3, %c0_59] : memref<8x2x1x4x8xf32, #tpu.memory_space<vmem>>, vector<8x1x1x1x8xf32>
    %61 = vector.shape_cast %60 : vector<8x1x1x1x8xf32> to vector<8x8xf32>
    %cst_60 = arith.constant 0.353553385 : f32
    %62 = vector.broadcast %cst_60 : f32 to vector<8x8xf32>
    %63 = arith.mulf %61, %62 : vector<8x8xf32>
    %c0_61 = arith.constant 0 : index
    %c0_62 = arith.constant 0 : index
    %c0_63 = arith.constant 0 : index
    %c3_64 = arith.constant 3 : index
    %c0_65 = arith.constant 0 : index
    %64 = vector.load %arg3[%c0_61, %c0_62, %c0_63, %c3_64, %c0_65] : memref<8x2x1x4x8xf32, #tpu.memory_space<vmem>>, vector<8x1x1x1x8xf32>
    %65 = vector.shape_cast %64 : vector<8x1x1x1x8xf32> to vector<8x8xf32>
    %c0_66 = arith.constant 0 : index
    %c0_67 = arith.constant 0 : index
    %c0_68 = arith.constant 0 : index
    %c3_69 = arith.constant 3 : index
    %c0_70 = arith.constant 0 : index
    %66 = vector.load %arg4[%c0_66, %c0_67, %c0_68, %c3_69, %c0_70] : memref<8x2x1x4x8xf32, #tpu.memory_space<vmem>>, vector<8x1x1x1x8xf32>
    %67 = vector.shape_cast %66 : vector<8x1x1x1x8xf32> to vector<8x8xf32>
    %cst_71 = arith.constant dense<0.000000e+00> : vector<8x8xf32>
    %68 = tpu.matmul %63, %65, %cst_71 {dimension_numbers = #tpu.dot_dimension_numbers<[1], [1], [0], [0], [0, 0, 1, 0], [], []>} : vector<8x8xf32>, vector<8x8xf32>, vector<8x8xf32> -> vector<8x8xf32>
    %cst_72 = arith.constant dense<0xFF800000> : vector<8xf32>
    %69 = vector.multi_reduction <maximumf>, %68, %cst_72 [1] : vector<8x8xf32> to vector<8xf32>
    %70 = vector.shape_cast %69 : vector<8xf32> to vector<8x1xf32>
    %71 = vector.broadcast %70 : vector<8x1xf32> to vector<8x8xf32>
    %72 = arith.subf %68, %71 : vector<8x8xf32>
    %73 = math.exp %72 : vector<8x8xf32>
    %cst_73 = arith.constant dense<0.000000e+00> : vector<8xf32>
    %74 = vector.multi_reduction <add>, %73, %cst_73 [1] : vector<8x8xf32> to vector<8xf32>
    %75 = vector.shape_cast %74 : vector<8xf32> to vector<8x1xf32>
    %76 = tpu.reciprocal %75 {approx = true} : vector<8x1xf32> -> vector<8x1xf32>
    %77 = vector.broadcast %76 : vector<8x1xf32> to vector<8x8xf32>
    %78 = arith.mulf %73, %77 : vector<8x8xf32>
    %cst_74 = arith.constant dense<0.000000e+00> : vector<8x8xf32>
    %79 = tpu.matmul %78, %67, %cst_74 {dimension_numbers = #tpu.dot_dimension_numbers<[1], [0], [0], [1], [0, 0, 1, 1], [], []>} : vector<8x8xf32>, vector<8x8xf32>, vector<8x8xf32> -> vector<8x8xf32>
    %80 = tpu.concatenate %19, %39, %59, %79 in 1 : vector<8x8xf32>, vector<8x8xf32>, vector<8x8xf32>, vector<8x8xf32> -> vector<8x32xf32>
    %c0_75 = arith.constant 0 : index
    %c0_76 = arith.constant 0 : index
    %c0_77 = arith.constant 0 : index
    %81 = vector.load %arg5[%c0_75, %c0_76, %c0_77] : memref<8x2x32xf32, #tpu.memory_space<vmem>>, vector<8x1x32xf32>
    %82 = vector.shape_cast %81 : vector<8x1x32xf32> to vector<8x32xf32>
    %83 = vector.shape_cast %80 : vector<8x32xf32> to vector<8x1x32xf32>
    tpu.vector_store %arg5[%c0_75, %c0_76, %c0_77], %83 {strides = array<i32>} : memref<8x2x32xf32, #tpu.memory_space<vmem>>, vector<8x1x32xf32>,
    %c0_78 = arith.constant 0 : index
    %c1_79 = arith.constant 1 : index
    %c0_80 = arith.constant 0 : index
    %c0_81 = arith.constant 0 : index
    %c0_82 = arith.constant 0 : index
    %84 = vector.load %arg2[%c0_78, %c1_79, %c0_80, %c0_81, %c0_82] : memref<8x2x1x4x8xf32, #tpu.memory_space<vmem>>, vector<8x1x1x1x8xf32>
    %85 = vector.shape_cast %84 : vector<8x1x1x1x8xf32> to vector<8x8xf32>
    %cst_83 = arith.constant 0.353553385 : f32
    %86 = vector.broadcast %cst_83 : f32 to vector<8x8xf32>
    %87 = arith.mulf %85, %86 : vector<8x8xf32>
    %c0_84 = arith.constant 0 : index
    %c1_85 = arith.constant 1 : index
    %c0_86 = arith.constant 0 : index
    %c0_87 = arith.constant 0 : index
    %c0_88 = arith.constant 0 : index
    %88 = vector.load %arg3[%c0_84, %c1_85, %c0_86, %c0_87, %c0_88] : memref<8x2x1x4x8xf32, #tpu.memory_space<vmem>>, vector<8x1x1x1x8xf32>
    %89 = vector.shape_cast %88 : vector<8x1x1x1x8xf32> to vector<8x8xf32>
    %c0_89 = arith.constant 0 : index
    %c1_90 = arith.constant 1 : index
    %c0_91 = arith.constant 0 : index
    %c0_92 = arith.constant 0 : index
    %c0_93 = arith.constant 0 : index
    %90 = vector.load %arg4[%c0_89, %c1_90, %c0_91, %c0_92, %c0_93] : memref<8x2x1x4x8xf32, #tpu.memory_space<vmem>>, vector<8x1x1x1x8xf32>
    %91 = vector.shape_cast %90 : vector<8x1x1x1x8xf32> to vector<8x8xf32>
    %cst_94 = arith.constant dense<0.000000e+00> : vector<8x8xf32>
    %92 = tpu.matmul %87, %89, %cst_94 {dimension_numbers = #tpu.dot_dimension_numbers<[1], [1], [0], [0], [0, 0, 1, 0], [], []>} : vector<8x8xf32>, vector<8x8xf32>, vector<8x8xf32> -> vector<8x8xf32>
    %cst_95 = arith.constant dense<0xFF800000> : vector<8xf32>
    %93 = vector.multi_reduction <maximumf>, %92, %cst_95 [1] : vector<8x8xf32> to vector<8xf32>
    %94 = vector.shape_cast %93 : vector<8xf32> to vector<8x1xf32>
    %95 = vector.broadcast %94 : vector<8x1xf32> to vector<8x8xf32>
    %96 = arith.subf %92, %95 : vector<8x8xf32>
    %97 = math.exp %96 : vector<8x8xf32>
    %cst_96 = arith.constant dense<0.000000e+00> : vector<8xf32>
    %98 = vector.multi_reduction <add>, %97, %cst_96 [1] : vector<8x8xf32> to vector<8xf32>
    %99 = vector.shape_cast %98 : vector<8xf32> to vector<8x1xf32>
    %100 = tpu.reciprocal %99 {approx = true} : vector<8x1xf32> -> vector<8x1xf32>
    %101 = vector.broadcast %100 : vector<8x1xf32> to vector<8x8xf32>
    %102 = arith.mulf %97, %101 : vector<8x8xf32>
    %cst_97 = arith.constant dense<0.000000e+00> : vector<8x8xf32>
    %103 = tpu.matmul %102, %91, %cst_97 {dimension_numbers = #tpu.dot_dimension_numbers<[1], [0], [0], [1], [0, 0, 1, 1], [], []>} : vector<8x8xf32>, vector<8x8xf32>, vector<8x8xf32> -> vector<8x8xf32>
    %c0_98 = arith.constant 0 : index
    %c1_99 = arith.constant 1 : index
    %c0_100 = arith.constant 0 : index
    %c1_101 = arith.constant 1 : index
    %c0_102 = arith.constant 0 : index
    %104 = vector.load %arg2[%c0_98, %c1_99, %c0_100, %c1_101, %c0_102] : memref<8x2x1x4x8xf32, #tpu.memory_space<vmem>>, vector<8x1x1x1x8xf32>
    %105 = vector.shape_cast %104 : vector<8x1x1x1x8xf32> to vector<8x8xf32>
    %cst_103 = arith.constant 0.353553385 : f32
    %106 = vector.broadcast %cst_103 : f32 to vector<8x8xf32>
    %107 = arith.mulf %105, %106 : vector<8x8xf32>
    %c0_104 = arith.constant 0 : index
    %c1_105 = arith.constant 1 : index
    %c0_106 = arith.constant 0 : index
    %c1_107 = arith.constant 1 : index
    %c0_108 = arith.constant 0 : index
    %108 = vector.load %arg3[%c0_104, %c1_105, %c0_106, %c1_107, %c0_108] : memref<8x2x1x4x8xf32, #tpu.memory_space<vmem>>, vector<8x1x1x1x8xf32>
    %109 = vector.shape_cast %108 : vector<8x1x1x1x8xf32> to vector<8x8xf32>
    %c0_109 = arith.constant 0 : index
    %c1_110 = arith.constant 1 : index
    %c0_111 = arith.constant 0 : index
    %c1_112 = arith.constant 1 : index
    %c0_113 = arith.constant 0 : index
    %110 = vector.load %arg4[%c0_109, %c1_110, %c0_111, %c1_112, %c0_113] : memref<8x2x1x4x8xf32, #tpu.memory_space<vmem>>, vector<8x1x1x1x8xf32>
    %111 = vector.shape_cast %110 : vector<8x1x1x1x8xf32> to vector<8x8xf32>
    %cst_114 = arith.constant dense<0.000000e+00> : vector<8x8xf32>
    %112 = tpu.matmul %107, %109, %cst_114 {dimension_numbers = #tpu.dot_dimension_numbers<[1], [1], [0], [0], [0, 0, 1, 0], [], []>} : vector<8x8xf32>, vector<8x8xf32>, vector<8x8xf32> -> vector<8x8xf32>
    %cst_115 = arith.constant dense<0xFF800000> : vector<8xf32>
    %113 = vector.multi_reduction <maximumf>, %112, %cst_115 [1] : vector<8x8xf32> to vector<8xf32>
    %114 = vector.shape_cast %113 : vector<8xf32> to vector<8x1xf32>
    %115 = vector.broadcast %114 : vector<8x1xf32> to vector<8x8xf32>
    %116 = arith.subf %112, %115 : vector<8x8xf32>
    %117 = math.exp %116 : vector<8x8xf32>
    %cst_116 = arith.constant dense<0.000000e+00> : vector<8xf32>
    %118 = vector.multi_reduction <add>, %117, %cst_116 [1] : vector<8x8xf32> to vector<8xf32>
    %119 = vector.shape_cast %118 : vector<8xf32> to vector<8x1xf32>
    %120 = tpu.reciprocal %119 {approx = true} : vector<8x1xf32> -> vector<8x1xf32>
    %121 = vector.broadcast %120 : vector<8x1xf32> to vector<8x8xf32>
    %122 = arith.mulf %117, %121 : vector<8x8xf32>
    %cst_117 = arith.constant dense<0.000000e+00> : vector<8x8xf32>
    %123 = tpu.matmul %122, %111, %cst_117 {dimension_numbers = #tpu.dot_dimension_numbers<[1], [0], [0], [1], [0, 0, 1, 1], [], []>} : vector<8x8xf32>, vector<8x8xf32>, vector<8x8xf32> -> vector<8x8xf32>
    %c0_118 = arith.constant 0 : index
    %c1_119 = arith.constant 1 : index
    %c0_120 = arith.constant 0 : index
    %c2_121 = arith.constant 2 : index
    %c0_122 = arith.constant 0 : index
    %124 = vector.load %arg2[%c0_118, %c1_119, %c0_120, %c2_121, %c0_122] : memref<8x2x1x4x8xf32, #tpu.memory_space<vmem>>, vector<8x1x1x1x8xf32>
    %125 = vector.shape_cast %124 : vector<8x1x1x1x8xf32> to vector<8x8xf32>
    %cst_123 = arith.constant 0.353553385 : f32
    %126 = vector.broadcast %cst_123 : f32 to vector<8x8xf32>
    %127 = arith.mulf %125, %126 : vector<8x8xf32>
    %c0_124 = arith.constant 0 : index
    %c1_125 = arith.constant 1 : index
    %c0_126 = arith.constant 0 : index
    %c2_127 = arith.constant 2 : index
    %c0_128 = arith.constant 0 : index
    %128 = vector.load %arg3[%c0_124, %c1_125, %c0_126, %c2_127, %c0_128] : memref<8x2x1x4x8xf32, #tpu.memory_space<vmem>>, vector<8x1x1x1x8xf32>
    %129 = vector.shape_cast %128 : vector<8x1x1x1x8xf32> to vector<8x8xf32>
    %c0_129 = arith.constant 0 : index
    %c1_130 = arith.constant 1 : index
    %c0_131 = arith.constant 0 : index
    %c2_132 = arith.constant 2 : index
    %c0_133 = arith.constant 0 : index
    %130 = vector.load %arg4[%c0_129, %c1_130, %c0_131, %c2_132, %c0_133] : memref<8x2x1x4x8xf32, #tpu.memory_space<vmem>>, vector<8x1x1x1x8xf32>
    %131 = vector.shape_cast %130 : vector<8x1x1x1x8xf32> to vector<8x8xf32>
    %cst_134 = arith.constant dense<0.000000e+00> : vector<8x8xf32>
    %132 = tpu.matmul %127, %129, %cst_134 {dimension_numbers = #tpu.dot_dimension_numbers<[1], [1], [0], [0], [0, 0, 1, 0], [], []>} : vector<8x8xf32>, vector<8x8xf32>, vector<8x8xf32> -> vector<8x8xf32>
    %cst_135 = arith.constant dense<0xFF800000> : vector<8xf32>
    %133 = vector.multi_reduction <maximumf>, %132, %cst_135 [1] : vector<8x8xf32> to vector<8xf32>
    %134 = vector.shape_cast %133 : vector<8xf32> to vector<8x1xf32>
    %135 = vector.broadcast %134 : vector<8x1xf32> to vector<8x8xf32>
    %136 = arith.subf %132, %135 : vector<8x8xf32>
    %137 = math.exp %136 : vector<8x8xf32>
    %cst_136 = arith.constant dense<0.000000e+00> : vector<8xf32>
    %138 = vector.multi_reduction <add>, %137, %cst_136 [1] : vector<8x8xf32> to vector<8xf32>
    %139 = vector.shape_cast %138 : vector<8xf32> to vector<8x1xf32>
    %140 = tpu.reciprocal %139 {approx = true} : vector<8x1xf32> -> vector<8x1xf32>
    %141 = vector.broadcast %140 : vector<8x1xf32> to vector<8x8xf32>
    %142 = arith.mulf %137, %141 : vector<8x8xf32>
    %cst_137 = arith.constant dense<0.000000e+00> : vector<8x8xf32>
    %143 = tpu.matmul %142, %131, %cst_137 {dimension_numbers = #tpu.dot_dimension_numbers<[1], [0], [0], [1], [0, 0, 1, 1], [], []>} : vector<8x8xf32>, vector<8x8xf32>, vector<8x8xf32> -> vector<8x8xf32>
    %c0_138 = arith.constant 0 : index
    %c1_139 = arith.constant 1 : index
    %c0_140 = arith.constant 0 : index
    %c3_141 = arith.constant 3 : index
    %c0_142 = arith.constant 0 : index
    %144 = vector.load %arg2[%c0_138, %c1_139, %c0_140, %c3_141, %c0_142] : memref<8x2x1x4x8xf32, #tpu.memory_space<vmem>>, vector<8x1x1x1x8xf32>
    %145 = vector.shape_cast %144 : vector<8x1x1x1x8xf32> to vector<8x8xf32>
    %cst_143 = arith.constant 0.353553385 : f32
    %146 = vector.broadcast %cst_143 : f32 to vector<8x8xf32>
    %147 = arith.mulf %145, %146 : vector<8x8xf32>
    %c0_144 = arith.constant 0 : index
    %c1_145 = arith.constant 1 : index
    %c0_146 = arith.constant 0 : index
    %c3_147 = arith.constant 3 : index
    %c0_148 = arith.constant 0 : index
    %148 = vector.load %arg3[%c0_144, %c1_145, %c0_146, %c3_147, %c0_148] : memref<8x2x1x4x8xf32, #tpu.memory_space<vmem>>, vector<8x1x1x1x8xf32>
    %149 = vector.shape_cast %148 : vector<8x1x1x1x8xf32> to vector<8x8xf32>
    %c0_149 = arith.constant 0 : index
    %c1_150 = arith.constant 1 : index
    %c0_151 = arith.constant 0 : index
    %c3_152 = arith.constant 3 : index
    %c0_153 = arith.constant 0 : index
    %150 = vector.load %arg4[%c0_149, %c1_150, %c0_151, %c3_152, %c0_153] : memref<8x2x1x4x8xf32, #tpu.memory_space<vmem>>, vector<8x1x1x1x8xf32>
    %151 = vector.shape_cast %150 : vector<8x1x1x1x8xf32> to vector<8x8xf32>
    %cst_154 = arith.constant dense<0.000000e+00> : vector<8x8xf32>
    %152 = tpu.matmul %147, %149, %cst_154 {dimension_numbers = #tpu.dot_dimension_numbers<[1], [1], [0], [0], [0, 0, 1, 0], [], []>} : vector<8x8xf32>, vector<8x8xf32>, vector<8x8xf32> -> vector<8x8xf32>
    %cst_155 = arith.constant dense<0xFF800000> : vector<8xf32>
    %153 = vector.multi_reduction <maximumf>, %152, %cst_155 [1] : vector<8x8xf32> to vector<8xf32>
    %154 = vector.shape_cast %153 : vector<8xf32> to vector<8x1xf32>
    %155 = vector.broadcast %154 : vector<8x1xf32> to vector<8x8xf32>
    %156 = arith.subf %152, %155 : vector<8x8xf32>
    %157 = math.exp %156 : vector<8x8xf32>
    %cst_156 = arith.constant dense<0.000000e+00> : vector<8xf32>
    %158 = vector.multi_reduction <add>, %157, %cst_156 [1] : vector<8x8xf32> to vector<8xf32>
    %159 = vector.shape_cast %158 : vector<8xf32> to vector<8x1xf32>
    %160 = tpu.reciprocal %159 {approx = true} : vector<8x1xf32> -> vector<8x1xf32>
    %161 = vector.broadcast %160 : vector<8x1xf32> to vector<8x8xf32>
    %162 = arith.mulf %157, %161 : vector<8x8xf32>
    %cst_157 = arith.constant dense<0.000000e+00> : vector<8x8xf32>
    %163 = tpu.matmul %162, %151, %cst_157 {dimension_numbers = #tpu.dot_dimension_numbers<[1], [0], [0], [1], [0, 0, 1, 1], [], []>} : vector<8x8xf32>, vector<8x8xf32>, vector<8x8xf32> -> vector<8x8xf32>
    %164 = tpu.concatenate %103, %123, %143, %163 in 1 : vector<8x8xf32>, vector<8x8xf32>, vector<8x8xf32>, vector<8x8xf32> -> vector<8x32xf32>
    %c0_158 = arith.constant 0 : index
    %c1_159 = arith.constant 1 : index
    %c0_160 = arith.constant 0 : index
    %165 = vector.load %arg5[%c0_158, %c1_159, %c0_160] : memref<8x2x32xf32, #tpu.memory_space<vmem>>, vector<8x1x32xf32>
    %166 = vector.shape_cast %165 : vector<8x1x32xf32> to vector<8x32xf32>
    %167 = vector.shape_cast %164 : vector<8x32xf32> to vector<8x1x32xf32>
    tpu.vector_store %arg5[%c0_158, %c1_159, %c0_160], %167 {strides = array<i32>} : memref<8x2x32xf32, #tpu.memory_space<vmem>>, vector<8x1x32xf32>,
    return
  }
  func.func @transform_0(%arg0: i32, %arg1: i32) -> (i32, i32, i32, i32, i32) {
    %c0_i32 = arith.constant 0 : i32
    %c0_i32_0 = arith.constant 0 : i32
    %c0_i32_1 = arith.constant 0 : i32
    %c0_i32_2 = arith.constant 0 : i32
    return %c0_i32, %arg0, %c0_i32_0, %arg1, %c0_i32_1 : i32, i32, i32, i32, i32
  }
  func.func @transform_1(%arg0: i32, %arg1: i32) -> (i32, i32, i32, i32, i32) {
    %c0_i32 = arith.constant 0 : i32
    %c1_i32 = arith.constant 1 : i32
    %c0_i32_0 = arith.constant 0 : i32
    %c0_i32_1 = arith.constant 0 : i32
    return %c0_i32, %arg0, %c1_i32, %arg1, %c0_i32_0 : i32, i32, i32, i32, i32
  }
  func.func @transform_2(%arg0: i32, %arg1: i32) -> (i32, i32, i32, i32, i32) {
    %c0_i32 = arith.constant 0 : i32
    %c2_i32 = arith.constant 2 : i32
    %c0_i32_0 = arith.constant 0 : i32
    %c0_i32_1 = arith.constant 0 : i32
    return %c0_i32, %arg0, %c2_i32, %arg1, %c0_i32_0 : i32, i32, i32, i32, i32
  }
  func.func @transform_3(%arg0: i32, %arg1: i32) -> (i32, i32, i32) {
    %c0_i32 = arith.constant 0 : i32
    %c0_i32_0 = arith.constant 0 : i32
    return %c0_i32, %arg0, %arg1 : i32, i32, i32
  }
}

module attributes {stable_mosaic.version = 11 : i64} {
  func.func @_linear_kernel(%arg0: i32, %arg1: i32, %arg2: i32, %arg3: memref<16x128xf32, #tpu.memory_space<vmem>>, %arg4: memref<128x128xf32, #tpu.memory_space<vmem>>, %arg5: memref<1x128xf32, #tpu.memory_space<vmem>>, %arg6: memref<16x128xf32, #tpu.memory_space<vmem>>, %arg7: memref<16x128xf32, #tpu.memory_space<vmem>>) attributes {dimension_semantics = [#tpu.dimension_semantics<parallel>, #tpu.dimension_semantics<parallel>, #tpu.dimension_semantics<arbitrary>], iteration_bounds = array<i64: 1, 1, 1>, scalar_prefetch = 0 : i64, scratch_operands = 1 : i64, tpu.core_type = #tpu.core_type<tc>, window_params = [{transform_indices = @transform_0, window_bounds = array<i64: 16, 128>}, {transform_indices = @transform_1, window_bounds = array<i64: 128, 128>}, {transform_indices = @transform_2, window_bounds = array<i64: 1, 128>}, {transform_indices = @transform_3, window_bounds = array<i64: 16, 128>}]} {
    %c0_i32 = arith.constant 0 : i32
    %0 = arith.cmpi eq, %arg2, %c0_i32 : i32
    %1 = arith.extui %0 : i1 to i32
    %c0_i32_0 = arith.constant 0 : i32
    %2 = arith.cmpi ne, %1, %c0_i32_0 : i32
    scf.if %2 {
      %cst_10 = arith.constant 0.000000e+00 : f32
      %12 = vector.broadcast %cst_10 : f32 to vector<16x128xf32>
      %c0_11 = arith.constant 0 : index
      %c0_12 = arith.constant 0 : index
      %13 = vector.load %arg7[%c0_11, %c0_12] : memref<16x128xf32, #tpu.memory_space<vmem>>, vector<16x128xf32>
      tpu.vector_store %arg7[%c0_11, %c0_12], %12 {strides = array<i32>} : memref<16x128xf32, #tpu.memory_space<vmem>>, vector<16x128xf32>,
    } else {
    }
    %c0 = arith.constant 0 : index
    %c0_1 = arith.constant 0 : index
    %3 = vector.load %arg7[%c0, %c0_1] : memref<16x128xf32, #tpu.memory_space<vmem>>, vector<16x128xf32>
    %c0_2 = arith.constant 0 : index
    %c0_3 = arith.constant 0 : index
    %4 = vector.load %arg3[%c0_2, %c0_3] : memref<16x128xf32, #tpu.memory_space<vmem>>, vector<16x128xf32>
    %c0_4 = arith.constant 0 : index
    %c0_5 = arith.constant 0 : index
    %5 = vector.load %arg4[%c0_4, %c0_5] : memref<128x128xf32, #tpu.memory_space<vmem>>, vector<128x128xf32>
    %cst = arith.constant dense<0.000000e+00> : vector<16x128xf32>
    %6 = tpu.matmul %4, %5, %cst {dimension_numbers = #tpu.dot_dimension_numbers<[1], [1], [0], [0], [0, 0, 1, 0], [], []>} : vector<16x128xf32>, vector<128x128xf32>, vector<16x128xf32> -> vector<16x128xf32>
    %7 = arith.addf %3, %6 : vector<16x128xf32>
    %c0_6 = arith.constant 0 : index
    %c0_7 = arith.constant 0 : index
    %8 = vector.load %arg7[%c0_6, %c0_7] : memref<16x128xf32, #tpu.memory_space<vmem>>, vector<16x128xf32>
    tpu.vector_store %arg7[%c0_6, %c0_7], %7 {strides = array<i32>} : memref<16x128xf32, #tpu.memory_space<vmem>>, vector<16x128xf32>,
    %c0_i32_8 = arith.constant 0 : i32
    %9 = arith.cmpi eq, %arg2, %c0_i32_8 : i32
    %10 = arith.extui %9 : i1 to i32
    %c0_i32_9 = arith.constant 0 : i32
    %11 = arith.cmpi ne, %10, %c0_i32_9 : i32
    scf.if %11 {
      %c0_10 = arith.constant 0 : index
      %c0_11 = arith.constant 0 : index
      %12 = vector.load %arg7[%c0_10, %c0_11] : memref<16x128xf32, #tpu.memory_space<vmem>>, vector<16x128xf32>
      %c0_12 = arith.constant 0 : index
      %c0_13 = arith.constant 0 : index
      %13 = vector.load %arg5[%c0_12, %c0_13] : memref<1x128xf32, #tpu.memory_space<vmem>>, vector<1x128xf32>
      %14 = vector.broadcast %13 : vector<1x128xf32> to vector<16x128xf32>
      %15 = arith.addf %12, %14 : vector<16x128xf32>
      %c0_14 = arith.constant 0 : index
      %c0_15 = arith.constant 0 : index
      %16 = vector.load %arg6[%c0_14, %c0_15] : memref<16x128xf32, #tpu.memory_space<vmem>>, vector<16x128xf32>
      tpu.vector_store %arg6[%c0_14, %c0_15], %15 {strides = array<i32>} : memref<16x128xf32, #tpu.memory_space<vmem>>, vector<16x128xf32>,
    } else {
    }
    return
  }
  func.func @transform_0(%arg0: i32, %arg1: i32, %arg2: i32) -> (i32, i32) {
    %c0_i32 = arith.constant 0 : i32
    return %arg0, %arg2 : i32, i32
  }
  func.func @transform_1(%arg0: i32, %arg1: i32, %arg2: i32) -> (i32, i32) {
    %c0_i32 = arith.constant 0 : i32
    return %arg1, %arg2 : i32, i32
  }
  func.func @transform_2(%arg0: i32, %arg1: i32, %arg2: i32) -> (i32, i32) {
    %c0_i32 = arith.constant 0 : i32
    %c0_i32_0 = arith.constant 0 : i32
    return %c0_i32, %arg1 : i32, i32
  }
  func.func @transform_3(%arg0: i32, %arg1: i32, %arg2: i32) -> (i32, i32) {
    %c0_i32 = arith.constant 0 : i32
    return %arg0, %arg1 : i32, i32
  }
}

</mosaic_0001>

<llo_original>
// kernel: memory_augmented_ctr_forward.4
$region0: #{memory_augmented_ctr_forward.4}
  #allocation0 [shape = 'u32[]', space=smem, size = 0x4, offset = 0x4, fixed_abs, tag = 'smem constant byte address 0x4 - core index']
  #allocation1 [shape = 'u32[72,128]{1,0:T(1,128)}', space=vmem, size = 0x9000, scoped, tag = 'internal scratch']
  %s0 = inlined_call_operand.vmem [shape: f32[8,2,32], index: 0, kind: input, shape index: {}]
  %s1 = inlined_call_operand.vmem [shape: f32[8,32], index: 1, kind: input, shape index: {}]
  %s2 = inlined_call_operand.vmem [shape: f32[8,2,32], index: 2, kind: output, shape index: {}]
  %s3 = sld [smem:[#allocation0]]
  $region18: #{memory_augmented_ctr_forward.4} parent=0
    _
  %s5 = ssub.s32 1, %s3
  %s6 = scalar_select 0, %s5, %s3
  // Predicated region
  $region2: #{memory_augmented_ctr_forward.4} parent=0 // pred_check
    _
  $region3: #{memory_augmented_ctr_forward.4} parent=0 // pred_check_branch
    %8 = sbr.rel (0) target = $region5
  $region4: #{memory_augmented_ctr_forward.4} parent=0 // pred_region
    _
  $region5: #{memory_augmented_ctr_forward.4} parent=0 // pred_fallthru
    _
  // Predicated region
  $region6: #{memory_augmented_ctr_forward.4} parent=0 // pred_check
    _
  $region7: #{memory_augmented_ctr_forward.4} parent=0 // pred_check_branch
    %10 = sbr.rel (0) target = $region9
  $region8: #{memory_augmented_ctr_forward.4} parent=0 // pred_region
    _
  $region9: #{memory_augmented_ctr_forward.4} parent=0 // pred_fallthru
    _
  %v11 = vld [vmem:[%s0] sm:$0x3]
  %v12 = vld [vmem:[%s0 + $0x2] sm:$0x3]
  %v13 = vld [vmem:[%s0 + $0x4] sm:$0x3]
  %v14 = vld [vmem:[%s0 + $0x6] sm:$0x3]
  %v15 = vld [vmem:[%s0 + $0x8] sm:$0x3]
  %v16 = vld [vmem:[%s0 + $0xa] sm:$0x3]
  %v17 = vld [vmem:[%s0 + $0xc] sm:$0x3]
  %v18 = vld [vmem:[%s0 + $0xe] sm:$0x3]
  %v19 = vld [vmem:[%s1] sm:$0xff]
  %v21 = vrot.slane %v19, 1
  %v22 = vrot.slane %v19, 2
  %v23 = vrot.slane %v19, 3
  %v24 = vrot.slane %v19, 4
  %v25 = vrot.slane %v19, 5
  %v26 = vrot.slane %v19, 6
  %v27 = vrot.slane %v19, 7
  %v28 = vperm.slane %v19, 0
  %v29 = vperm.slane %v21, 0
  %v30 = vperm.slane %v22, 0
  %v31 = vperm.slane %v23, 0
  %v32 = vperm.slane %v24, 0
  %v33 = vperm.slane %v25, 0
  %v34 = vperm.slane %v26, 0
  %v35 = vperm.slane %v27, 0
  %v44 = vadd.f32 %v11, %v28
  %v45 = vadd.f32 %v12, %v29
  %v46 = vadd.f32 %v13, %v30
  %v47 = vadd.f32 %v14, %v31
  %v48 = vadd.f32 %v15, %v32
  %v49 = vadd.f32 %v16, %v33
  %v50 = vadd.f32 %v17, %v34
  %v51 = vadd.f32 %v18, %v35
  %vm52 = vcmask 254976
  %53 = vst.msk [vmem:[%s2] sm:$0x3] %vm52, %v44
  %54 = vst.msk [vmem:[%s2 + $0x2] sm:$0x3] %vm52, %v45
  %55 = vst.msk [vmem:[%s2 + $0x4] sm:$0x3] %vm52, %v46
  %56 = vst.msk [vmem:[%s2 + $0x6] sm:$0x3] %vm52, %v47
  %57 = vst.msk [vmem:[%s2 + $0x8] sm:$0x3] %vm52, %v48
  %58 = vst.msk [vmem:[%s2 + $0xa] sm:$0x3] %vm52, %v49
  %59 = vst.msk [vmem:[%s2 + $0xc] sm:$0x3] %vm52, %v50
  %60 = vst.msk [vmem:[%s2 + $0xe] sm:$0x3] %vm52, %v51
  // Predicated region
  $region10: #{memory_augmented_ctr_forward.4} parent=0 // pred_check
    _
  $region11: #{memory_augmented_ctr_forward.4} parent=0 // pred_check_branch
    %62 = sbr.rel (0) target = $region13
  $region12: #{memory_augmented_ctr_forward.4} parent=0 // pred_region
    _
  $region13: #{memory_augmented_ctr_forward.4} parent=0 // pred_fallthru
    _
  // Predicated region
  $region14: #{memory_augmented_ctr_forward.4} parent=0 // pred_check
    _
  $region15: #{memory_augmented_ctr_forward.4} parent=0 // pred_check_branch
    %64 = sbr.rel (0) target = $region17
  $region16: #{memory_augmented_ctr_forward.4} parent=0 // pred_region
    _
  $region17: #{memory_augmented_ctr_forward.4} parent=0 // pred_fallthru
    _

// kernel: memory_augmented_ctr_forward.5
$region0: #{memory_augmented_ctr_forward.5}
  #allocation0 [shape = 'u32[]', space=smem, size = 0x4, offset = 0x4, fixed_abs, tag = 'smem constant byte address 0x4 - core index']
  #allocation1 [shape = 'u32[72,128]{1,0:T(1,128)}', space=vmem, size = 0x9000, scoped, tag = 'internal scratch']
  #allocation2 [shape = 'f32[16,128]{1,0:T(8,128)}', space=vmem, size = 0x2000, scoped, tag = 'scratch operand']
  %s0 = inlined_call_operand.vmem [shape: f32[16,128], index: 0, kind: input, shape index: {}]
  %s1 = inlined_call_operand.vmem [shape: f32[128,128], index: 1, kind: input, shape index: {}]
  %s2 = inlined_call_operand.vmem [shape: f32[1,128], index: 2, kind: input, shape index: {}]
  %s3 = inlined_call_operand.vmem [shape: f32[16,128], index: 3, kind: output, shape index: {}]
  %s4 = sld [smem:[#allocation0]]
  $region30: #{memory_augmented_ctr_forward.5} parent=0
    _
  %s6 = ssub.s32 1, %s4
  %s7 = scalar_select 0, %s6, %s4
  // Predicated region
  $region2: #{memory_augmented_ctr_forward.5} parent=0 // pred_check
    _
  $region3: #{memory_augmented_ctr_forward.5} parent=0 // pred_check_branch
    %9 = sbr.rel (0) target = $region5
  $region4: #{memory_augmented_ctr_forward.5} parent=0 // pred_region
    _
  $region5: #{memory_augmented_ctr_forward.5} parent=0 // pred_fallthru
    _
  // Predicated region
  $region6: #{memory_augmented_ctr_forward.5} parent=0 // pred_check
    _
  $region7: #{memory_augmented_ctr_forward.5} parent=0 // pred_check_branch
    %11 = sbr.rel (0) target = $region9
  $region8: #{memory_augmented_ctr_forward.5} parent=0 // pred_region
    _
  $region9: #{memory_augmented_ctr_forward.5} parent=0 // pred_fallthru
    _
  // Predicated region
  $region10: #{memory_augmented_ctr_forward.5} parent=0 // pred_check
    _
  $region11: #{memory_augmented_ctr_forward.5} parent=0 // pred_check_branch
    %13 = sbr.rel (0) target = $region13
  $region12: #{memory_augmented_ctr_forward.5} parent=0 // pred_region
    _
  $region13: #{memory_augmented_ctr_forward.5} parent=0 // pred_fallthru
    _
  %p14 = scmp.eq.s32.totalorder 0, 0
  // Predicated region
  $region14: #{memory_augmented_ctr_forward.5} parent=0 // pred_check
    %p15 = pneg %p14
  $region15: #{memory_augmented_ctr_forward.5} parent=0 // pred_check_branch
    %17 = sbr.rel (%p15) target = $region17
  $region16: #{memory_augmented_ctr_forward.5} parent=0 // pred_region
    %18 = vst [vmem:[#allocation2] sm:$0xff] 0.0
    %19 = vst [vmem:[#allocation2 + $0x8] sm:$0xff] 0.0
  $region17: #{memory_augmented_ctr_forward.5} parent=0 // pred_fallthru
    _
  %v20 = vld [vmem:[#allocation2] sm:$0xff]
  %v21 = vld [vmem:[#allocation2 + $0x8] sm:$0xff]
  %v22 = vld [vmem:[%s0] sm:$0xff]
  %v23 = vld [vmem:[%s0 + $0x8] sm:$0xff]
  %v24 = vld [vmem:[%s1] sm:$0xff]
  %v25 = vld [vmem:[%s1 + $0x8] sm:$0xff]
  %v26 = vld [vmem:[%s1 + $0x10] sm:$0xff]
  %v27 = vld [vmem:[%s1 + $0x18] sm:$0xff]
  %v28 = vld [vmem:[%s1 + $0x20] sm:$0xff]
  %v29 = vld [vmem:[%s1 + $0x28] sm:$0xff]
  %v30 = vld [vmem:[%s1 + $0x30] sm:$0xff]
  %v31 = vld [vmem:[%s1 + $0x38] sm:$0xff]
  %v32 = vld [vmem:[%s1 + $0x40] sm:$0xff]
  %v33 = vld [vmem:[%s1 + $0x48] sm:$0xff]
  %v34 = vld [vmem:[%s1 + $0x50] sm:$0xff]
  %v35 = vld [vmem:[%s1 + $0x58] sm:$0xff]
  %v36 = vld [vmem:[%s1 + $0x60] sm:$0xff]
  %v37 = vld [vmem:[%s1 + $0x68] sm:$0xff]
  %v38 = vld [vmem:[%s1 + $0x70] sm:$0xff]
  %v39 = vld [vmem:[%s1 + $0x78] sm:$0xff]
  %40 = vmatpush.xpose.msra.mxu0 %v39
  %41 = vmatpush.xpose.msra.mxu0 %v38
  %42 = vmatpush.xpose.msra.mxu0 %v37
  %43 = vmatpush.xpose.msra.mxu0 %v36
  %44 = vmatpush.xpose.msra.mxu0 %v35
  %45 = vmatpush.xpose.msra.mxu0 %v34
  %46 = vmatpush.xpose.msra.mxu0 %v33
  %47 = vmatpush.xpose.msra.mxu0 %v32
  %48 = vmatpush.xpose.msra.mxu0 %v31
  %49 = vmatpush.xpose.msra.mxu0 %v30
  %50 = vmatpush.xpose.msra.mxu0 %v29
  %51 = vmatpush.xpose.msra.mxu0 %v28
  %52 = vmatpush.xpose.msra.mxu0 %v27
  %53 = vmatpush.xpose.msra.mxu0 %v26
  %54 = vmatpush.xpose.msra.mxu0 %v25
  %55 = vmatpush.xpose.msra.mxu0 %v24
  %56 = vmatmul.f32.gmra.mxu0 %v22
  %v57 = vpop.f32.mrf.mxu0
  %v58 = vadd.f32 0.0, %v57
  %59 = vmatmul.f32.gmra.mxu0 %v23
  %v60 = vpop.f32.mrf.mxu0
  %v61 = vadd.f32 0.0, %v60
  %62 = vdwg.mxu0
  %v63 = vadd.f32 %v20, %v58
  %v64 = vadd.f32 %v21, %v61
  %65 = vst [vmem:[#allocation2] sm:$0xff] %v63
  %66 = vst [vmem:[#allocation2 + $0x8] sm:$0xff] %v64
  // Predicated region
  $region18: #{memory_augmented_ctr_forward.5} parent=0 // pred_check
    %p67 = pneg %p14
  $region19: #{memory_augmented_ctr_forward.5} parent=0 // pred_check_branch
    %69 = sbr.rel (%p67) target = $region21
  $region20: #{memory_augmented_ctr_forward.5} parent=0 // pred_region
    %v70 = vld [vmem:[#allocation2] sm:$0xff]
    %v71 = vld [vmem:[#allocation2 + $0x8] sm:$0xff]
    %v72 = vld [vmem:[%s2] sm:$0x1]
    %v74 = vperm.slane %v72, 0
    %v76 = vadd.f32 %v70, %v74
    %v77 = vadd.f32 %v71, %v74
    %78 = vst [vmem:[%s3] sm:$0xff] %v76
    %79 = vst [vmem:[%s3 + $0x8] sm:$0xff] %v77
  $region21: #{memory_augmented_ctr_forward.5} parent=0 // pred_fallthru
    _
  // Predicated region
  $region22: #{memory_augmented_ctr_forward.5} parent=0 // pred_check
    _
  $region23: #{memory_augmented_ctr_forward.5} parent=0 // pred_check_branch
    %81 = sbr.rel (0) target = $region25
  $region24: #{memory_augmented_ctr_forward.5} parent=0 // pred_region
    _
  $region25: #{memory_augmented_ctr_forward.5} parent=0 // pred_fallthru
    _
  // Predicated region
  $region26: #{memory_augmented_ctr_forward.5} parent=0 // pred_check
    _
  $region27: #{memory_augmented_ctr_forward.5} parent=0 // pred_check_branch
    %83 = sbr.rel (0) target = $region29
  $region28: #{memory_augmented_ctr_forward.5} parent=0 // pred_region
    _
  $region29: #{memory_augmented_ctr_forward.5} parent=0 // pred_fallthru
    _

// kernel: memory_augmented_ctr_forward.7
$region0: #{memory_augmented_ctr_forward.7}
  #allocation0 [shape = 'u32[]', space=smem, size = 0x4, offset = 0x4, fixed_abs, tag = 'smem constant byte address 0x4 - core index']
  #allocation1 [shape = 'u32[72,128]{1,0:T(1,128)}', space=vmem, size = 0x9000, scoped, tag = 'internal scratch']
  #allocation2 [shape = 'f32[16,128]{1,0:T(8,128)}', space=vmem, size = 0x2000, scoped, tag = 'scratch operand']
  %s0 = inlined_call_operand.vmem [shape: f32[16,128], index: 0, kind: input, shape index: {}]
  %s1 = inlined_call_operand.vmem [shape: f32[128,128], index: 1, kind: input, shape index: {}]
  %s2 = inlined_call_operand.vmem [shape: f32[1,128], index: 2, kind: input, shape index: {}]
  %s3 = inlined_call_operand.hbm [shape: f32[16,128], index: 3, kind: output, shape index: {}]
  %s4 = sld [smem:[#allocation0]]
  $region30: #{memory_augmented_ctr_forward.7} parent=0
    _
  %s6 = ssub.s32 1, %s4
  %s7 = scalar_select 0, %s6, %s4
  $region1: #{memory_augmented_ctr_forward.7} parent=0
    #allocation3 [shape = 'u8[8192]{0}', space=vmem, size = 0x2000, scoped, tag = 'output window, operand 0, single buffered']
    #allocation4 [shape = 's32[1]{0}', space=sflag, size = 0x4, scoped, tag = 'scoped memory for memory_augmented_ctr_forward.7']
    %8 = vsyncpa [#allocation4], 0
    // Predicated region
    $region2: #{memory_augmented_ctr_forward.7} parent=1 // pred_check
      _
    $region3: #{memory_augmented_ctr_forward.7} parent=1 // pred_check_branch
      %10 = sbr.rel (0) target = $region5
    $region4: #{memory_augmented_ctr_forward.7} parent=1 // pred_region
      _
    $region5: #{memory_augmented_ctr_forward.7} parent=1 // pred_fallthru
      _
    // Predicated region
    $region6: #{memory_augmented_ctr_forward.7} parent=1 // pred_check
      _
    $region7: #{memory_augmented_ctr_forward.7} parent=1 // pred_check_branch
      %12 = sbr.rel (0) target = $region9
    $region8: #{memory_augmented_ctr_forward.7} parent=1 // pred_region
      _
    $region9: #{memory_augmented_ctr_forward.7} parent=1 // pred_fallthru
      _
    // Predicated region
    $region10: #{memory_augmented_ctr_forward.7} parent=1 // pred_check
      _
    $region11: #{memory_augmented_ctr_forward.7} parent=1 // pred_check_branch
      %14 = sbr.rel (0) target = $region13
    $region12: #{memory_augmented_ctr_forward.7} parent=1 // pred_region
      _
    $region13: #{memory_augmented_ctr_forward.7} parent=1 // pred_fallthru
      _
    %p15 = scmp.eq.s32.totalorder 0, 0
    // Predicated region
    $region14: #{memory_augmented_ctr_forward.7} parent=1 // pred_check
      %p16 = pneg %p15
    $region15: #{memory_augmented_ctr_forward.7} parent=1 // pred_check_branch
      %18 = sbr.rel (%p16) target = $region17
    $region16: #{memory_augmented_ctr_forward.7} parent=1 // pred_region
      %19 = vst [vmem:[#allocation2] sm:$0xff] 0.0
      %20 = vst [vmem:[#allocation2 + $0x8] sm:$0xff] 0.0
    $region17: #{memory_augmented_ctr_forward.7} parent=1 // pred_fallthru
      _
    %v21 = vld [vmem:[#allocation2] sm:$0xff]
    %v22 = vld [vmem:[#allocation2 + $0x8] sm:$0xff]
    %v23 = vld [vmem:[%s0] sm:$0xff]
    %v24 = vld [vmem:[%s0 + $0x8] sm:$0xff]
    %v25 = vld [vmem:[%s1] sm:$0xff]
    %v26 = vld [vmem:[%s1 + $0x8] sm:$0xff]
    %v27 = vld [vmem:[%s1 + $0x10] sm:$0xff]
    %v28 = vld [vmem:[%s1 + $0x18] sm:$0xff]
    %v29 = vld [vmem:[%s1 + $0x20] sm:$0xff]
    %v30 = vld [vmem:[%s1 + $0x28] sm:$0xff]
    %v31 = vld [vmem:[%s1 + $0x30] sm:$0xff]
    %v32 = vld [vmem:[%s1 + $0x38] sm:$0xff]
    %v33 = vld [vmem:[%s1 + $0x40] sm:$0xff]
    %v34 = vld [vmem:[%s1 + $0x48] sm:$0xff]
    %v35 = vld [vmem:[%s1 + $0x50] sm:$0xff]
    %v36 = vld [vmem:[%s1 + $0x58] sm:$0xff]
    %v37 = vld [vmem:[%s1 + $0x60] sm:$0xff]
    %v38 = vld [vmem:[%s1 + $0x68] sm:$0xff]
    %v39 = vld [vmem:[%s1 + $0x70] sm:$0xff]
    %v40 = vld [vmem:[%s1 + $0x78] sm:$0xff]
    %41 = vmatpush.xpose.msra.mxu0 %v40
    %42 = vmatpush.xpose.msra.mxu0 %v39
    %43 = vmatpush.xpose.msra.mxu0 %v38
    %44 = vmatpush.xpose.msra.mxu0 %v37
    %45 = vmatpush.xpose.msra.mxu0 %v36
    %46 = vmatpush.xpose.msra.mxu0 %v35
    %47 = vmatpush.xpose.msra.mxu0 %v34
    %48 = vmatpush.xpose.msra.mxu0 %v33
    %49 = vmatpush.xpose.msra.mxu0 %v32
    %50 = vmatpush.xpose.msra.mxu0 %v31
    %51 = vmatpush.xpose.msra.mxu0 %v30
    %52 = vmatpush.xpose.msra.mxu0 %v29
    %53 = vmatpush.xpose.msra.mxu0 %v28
    %54 = vmatpush.xpose.msra.mxu0 %v27
    %55 = vmatpush.xpose.msra.mxu0 %v26
    %56 = vmatpush.xpose.msra.mxu0 %v25
    %57 = vmatmul.f32.gmra.mxu0 %v23
    %v58 = vpop.f32.mrf.mxu0
    %v59 = vadd.f32 0.0, %v58
    %60 = vmatmul.f32.gmra.mxu0 %v24
    %v61 = vpop.f32.mrf.mxu0
    %v62 = vadd.f32 0.0, %v61
    %63 = vdwg.mxu0
    %v64 = vadd.f32 %v21, %v59
    %v65 = vadd.f32 %v22, %v62
    %66 = vst [vmem:[#allocation2] sm:$0xff] %v64
    %67 = vst [vmem:[#allocation2 + $0x8] sm:$0xff] %v65
    // Predicated region
    $region18: #{memory_augmented_ctr_forward.7} parent=1 // pred_check
      %p68 = pneg %p15
    $region19: #{memory_augmented_ctr_forward.7} parent=1 // pred_check_branch
      %70 = sbr.rel (%p68) target = $region21
    $region20: #{memory_augmented_ctr_forward.7} parent=1 // pred_region
      %v71 = vld [vmem:[#allocation2] sm:$0xff]
      %v72 = vld [vmem:[#allocation2 + $0x8] sm:$0xff]
      %v73 = vld [vmem:[%s2] sm:$0x1]
      %v75 = vperm.slane %v73, 0
      %v77 = vadd.f32 %v71, %v75
      %v78 = vadd.f32 %v72, %v75
      %79 = vst [vmem:[#allocation3] sm:$0xff] %v77
      %80 = vst [vmem:[#allocation3 + $0x8] sm:$0xff] %v78
    $region21: #{memory_augmented_ctr_forward.7} parent=1 // pred_fallthru
      _
    // Predicated region
    $region22: #{memory_augmented_ctr_forward.7} parent=1 // pred_check
      _
    $region23: #{memory_augmented_ctr_forward.7} parent=1 // pred_check_branch
      %82 = sbr.rel (0) target = $region25
    $region24: #{memory_augmented_ctr_forward.7} parent=1 // pred_region
      %84 = vsyncadd [#allocation4], 0
      %s85 = sshll.u32 [#allocation3], 4
      %s86 = int_to_ptr.vmem [resolvable:$true] %s85
      %s87 = sshll.u32 %s3, 4
      %s88 = int_to_ptr.hbm [resolvable:$true] %s87
      %93 = dma.vmem_to_hbm [thread:$0]  %s86, 256, %s88, [#allocation4], 128, 128, 8
    $region25: #{memory_augmented_ctr_forward.7} parent=1 // pred_fallthru
      _
    // Predicated region
    $region26: #{memory_augmented_ctr_forward.7} parent=1 // pred_check
      _
    $region27: #{memory_augmented_ctr_forward.7} parent=1 // pred_check_branch
      %95 = sbr.rel (0) target = $region29
    $region28: #{memory_augmented_ctr_forward.7} parent=1 // pred_region
      %97 = dma.done [#allocation4], 256
    $region29: #{memory_augmented_ctr_forward.7} parent=1 // pred_fallthru
      _
    %98 = vsyncpa [#allocation4], 1

// kernel: memory_augmented_ctr_forward.6
$region0: #{memory_augmented_ctr_forward.6}
  #allocation0 [shape = 'u32[]', space=smem, size = 0x4, offset = 0x4, fixed_abs, tag = 'smem constant byte address 0x4 - core index']
  #allocation1 [shape = 'u32[72,128]{1,0:T(1,128)}', space=vmem, size = 0x9000, scoped, tag = 'internal scratch']
  %s0 = inlined_call_operand.vmem [shape: f32[8,2,3,4,8], index: 0, kind: input, shape index: {}, may-alias: {0,1,2}]
  %s1 = inlined_call_operand.vmem [shape: f32[8,2,3,4,8], index: 1, kind: input, shape index: {}, may-alias: {0,1,2}]
  %s2 = inlined_call_operand.vmem [shape: f32[8,2,3,4,8], index: 2, kind: input, shape index: {}, may-alias: {0,1,2}]
  %s3 = inlined_call_operand.vmem [shape: f32[8,2,32], index: 3, kind: output, shape index: {}]
  %s4 = sld [smem:[#allocation0]]
  $region145: #{memory_augmented_ctr_forward.6} parent=0
    _
  %s6 = ssub.s32 1, %s4
  %s7 = scalar_select 0, %s6, %s4
  $region1: #{memory_augmented_ctr_forward.6} parent=0
    #allocation2 [shape = 'u8[32768]{0}', space=vmem, size = 0x8000, scoped, tag = 'input window, operand 0, single buffered']
    #allocation3 [shape = 'u8[32768]{0}', space=vmem, size = 0x8000, scoped, tag = 'input window, operand 1, single buffered']
    #allocation4 [shape = 'u8[32768]{0}', space=vmem, size = 0x8000, scoped, tag = 'input window, operand 2, single buffered']
    // Predicated region
    $region2: #{memory_augmented_ctr_forward.6} parent=1 // pred_check
      _
    $region3: #{memory_augmented_ctr_forward.6} parent=1 // pred_check_branch
      %9 = sbr.rel (0) target = $region5
    $region4: #{memory_augmented_ctr_forward.6} parent=1 // pred_region
      // Predicated region
      $region6: #{memory_augmented_ctr_forward.6} parent=4 // pred_check
        _
      $region7: #{memory_augmented_ctr_forward.6} parent=4 // pred_check_branch
        %11 = sbr.rel (0) target = $region9
      $region8: #{memory_augmented_ctr_forward.6} parent=4 // pred_region
        // Predicated region
        $region10: #{memory_augmented_ctr_forward.6} parent=8 // pred_check
          _
        $region11: #{memory_augmented_ctr_forward.6} parent=8 // pred_check_branch
          %13 = sbr.rel target = $region13
        $region12: #{memory_augmented_ctr_forward.6} parent=8 // pred_region
          // Predicated region
          $region25: #{memory_augmented_ctr_forward.6} parent=12 // pred_check
            _
          $region26: #{memory_augmented_ctr_forward.6} parent=12 // pred_check_branch
            %59 = sbr.rel (0) target = $region28
          $region27: #{memory_augmented_ctr_forward.6} parent=12 // pred_region
            loop: start=0, step=1, limit=1
            $region29: #{memory_augmented_ctr_forward.6} parent=27 // loop_pre_header
              _
            $region30: #{memory_augmented_ctr_forward.6} parent=27 // loop_header
              %s61 = sphi 0, %s65
              %p62 = scmp.ge.s32.totalorder %s61, 1
              %s66 = sphi %s0, %s0
              %s67 = sphi [#allocation2], [#allocation2]
            $region31: #{memory_augmented_ctr_forward.6} parent=27 // loop_header_branch
              %64 = sbr.rel (%p62) target = $region35
            $region32: #{memory_augmented_ctr_forward.6} parent=27 // loop_body
              _
            $region33: #{memory_augmented_ctr_forward.6} parent=27 // loop_footer
              %s65 = sadd.s32 1, %s61
            $region34: #{memory_augmented_ctr_forward.6} parent=27 // loop_footer_branch
              %60 = sbr.rel target = $region30
            $region35: #{memory_augmented_ctr_forward.6} parent=27 // loop_exit
              _
            %s69 = ssub.s32 16, 1
            loop: start=0, step=1, limit=1
            $region36: #{memory_augmented_ctr_forward.6} parent=27 // loop_pre_header
              _
            $region37: #{memory_augmented_ctr_forward.6} parent=27 // loop_header
              %s71 = sphi 0, %s75
              %p72 = scmp.ge.s32.totalorder %s71, 1
              %s76 = sphi %s0, %s0
              %s77 = sphi [#allocation2], [#allocation2]
            $region38: #{memory_augmented_ctr_forward.6} parent=27 // loop_header_branch
              %74 = sbr.rel (%p72) target = $region42
            $region39: #{memory_augmented_ctr_forward.6} parent=27 // loop_body
              %v78 = vld [vmem:[%s76] sm:%s69]
              %79 = vst [vmem:[%s77] sm:%s69] %v78
              %v80 = vld [vmem:[%s76 + $0xc] sm:%s69]
              %81 = vst [vmem:[%s77 + $0x4] sm:%s69] %v80
              %v82 = vld [vmem:[%s76 + $0x18] sm:%s69]
              %83 = vst [vmem:[%s77 + $0x8] sm:%s69] %v82
              %v84 = vld [vmem:[%s76 + $0x24] sm:%s69]
              %85 = vst [vmem:[%s77 + $0xc] sm:%s69] %v84
              %v86 = vld [vmem:[%s76 + $0x30] sm:%s69]
              %87 = vst [vmem:[%s77 + $0x10] sm:%s69] %v86
              %v88 = vld [vmem:[%s76 + $0x3c] sm:%s69]
              %89 = vst [vmem:[%s77 + $0x14] sm:%s69] %v88
              %v90 = vld [vmem:[%s76 + $0x48] sm:%s69]
              %91 = vst [vmem:[%s77 + $0x18] sm:%s69] %v90
              %v92 = vld [vmem:[%s76 + $0x54] sm:%s69]
              %93 = vst [vmem:[%s77 + $0x1c] sm:%s69] %v92
              %v94 = vld [vmem:[%s76 + $0x60] sm:%s69]
              %95 = vst [vmem:[%s77 + $0x20] sm:%s69] %v94
              %v96 = vld [vmem:[%s76 + $0x6c] sm:%s69]
              %97 = vst [vmem:[%s77 + $0x24] sm:%s69] %v96
              %v98 = vld [vmem:[%s76 + $0x78] sm:%s69]
              %99 = vst [vmem:[%s77 + $0x28] sm:%s69] %v98
              %v100 = vld [vmem:[%s76 + $0x84] sm:%s69]
              %101 = vst [vmem:[%s77 + $0x2c] sm:%s69] %v100
              %v102 = vld [vmem:[%s76 + $0x90] sm:%s69]
              %103 = vst [vmem:[%s77 + $0x30] sm:%s69] %v102
              %v104 = vld [vmem:[%s76 + $0x9c] sm:%s69]
              %105 = vst [vmem:[%s77 + $0x34] sm:%s69] %v104
              %v106 = vld [vmem:[%s76 + $0xa8] sm:%s69]
              %107 = vst [vmem:[%s77 + $0x38] sm:%s69] %v106
              %v108 = vld [vmem:[%s76 + $0xb4] sm:%s69]
              %109 = vst [vmem:[%s77 + $0x3c] sm:%s69] %v108
            $region40: #{memory_augmented_ctr_forward.6} parent=27 // loop_footer
              %s75 = sadd.s32 1, %s71
            $region41: #{memory_augmented_ctr_forward.6} parent=27 // loop_footer_branch
              %70 = sbr.rel target = $region37
            $region42: #{memory_augmented_ctr_forward.6} parent=27 // loop_exit
              _
          $region28: #{memory_augmented_ctr_forward.6} parent=12 // pred_fallthru
            _
        $region13: #{memory_augmented_ctr_forward.6} parent=8 // pred_fallthru
          _
        // Predicated region
        $region14: #{memory_augmented_ctr_forward.6} parent=8 // pred_check
          _
        $region15: #{memory_augmented_ctr_forward.6} parent=8 // pred_check_branch
          %15 = sbr.rel (0) target = $region17
        $region16: #{memory_augmented_ctr_forward.6} parent=8 // pred_region
          %s17 = ssub.s32 16, 1
          loop: start=0, step=1, limit=1
          $region18: #{memory_augmented_ctr_forward.6} parent=16 // loop_pre_header
            _
          $region19: #{memory_augmented_ctr_forward.6} parent=16 // loop_header
            %s19 = sphi 0, %s23
            %p20 = scmp.ge.s32.totalorder %s19, 1
            %s24 = sphi %s0, %s0
            %s25 = sphi [#allocation2], [#allocation2]
          $region20: #{memory_augmented_ctr_forward.6} parent=16 // loop_header_branch
            %22 = sbr.rel (%p20) target = $region24
          $region21: #{memory_augmented_ctr_forward.6} parent=16 // loop_body
            %v26 = vld [vmem:[%s24] sm:%s17]
            %27 = vst [vmem:[%s25] sm:%s17] %v26
            %v28 = vld [vmem:[%s24 + $0xc] sm:%s17]
            %29 = vst [vmem:[%s25 + $0x4] sm:%s17] %v28
            %v30 = vld [vmem:[%s24 + $0x18] sm:%s17]
            %31 = vst [vmem:[%s25 + $0x8] sm:%s17] %v30
            %v32 = vld [vmem:[%s24 + $0x24] sm:%s17]
            %33 = vst [vmem:[%s25 + $0xc] sm:%s17] %v32
            %v34 = vld [vmem:[%s24 + $0x30] sm:%s17]
            %35 = vst [vmem:[%s25 + $0x10] sm:%s17] %v34
            %v36 = vld [vmem:[%s24 + $0x3c] sm:%s17]
            %37 = vst [vmem:[%s25 + $0x14] sm:%s17] %v36
            %v38 = vld [vmem:[%s24 + $0x48] sm:%s17]
            %39 = vst [vmem:[%s25 + $0x18] sm:%s17] %v38
            %v40 = vld [vmem:[%s24 + $0x54] sm:%s17]
            %41 = vst [vmem:[%s25 + $0x1c] sm:%s17] %v40
            %v42 = vld [vmem:[%s24 + $0x60] sm:%s17]
            %43 = vst [vmem:[%s25 + $0x20] sm:%s17] %v42
            %v44 = vld [vmem:[%s24 + $0x6c] sm:%s17]
            %45 = vst [vmem:[%s25 + $0x24] sm:%s17] %v44
            %v46 = vld [vmem:[%s24 + $0x78] sm:%s17]
            %47 = vst [vmem:[%s25 + $0x28] sm:%s17] %v46
            %v48 = vld [vmem:[%s24 + $0x84] sm:%s17]
            %49 = vst [vmem:[%s25 + $0x2c] sm:%s17] %v48
            %v50 = vld [vmem:[%s24 + $0x90] sm:%s17]
            %51 = vst [vmem:[%s25 + $0x30] sm:%s17] %v50
            %v52 = vld [vmem:[%s24 + $0x9c] sm:%s17]
            %53 = vst [vmem:[%s25 + $0x34] sm:%s17] %v52
            %v54 = vld [vmem:[%s24 + $0xa8] sm:%s17]
            %55 = vst [vmem:[%s25 + $0x38] sm:%s17] %v54
            %v56 = vld [vmem:[%s24 + $0xb4] sm:%s17]
            %57 = vst [vmem:[%s25 + $0x3c] sm:%s17] %v56
          $region22: #{memory_augmented_ctr_forward.6} parent=16 // loop_footer
            %s23 = sadd.s32 1, %s19
          $region23: #{memory_augmented_ctr_forward.6} parent=16 // loop_footer_branch
            %18 = sbr.rel target = $region19
          $region24: #{memory_augmented_ctr_forward.6} parent=16 // loop_exit
            _
        $region17: #{memory_augmented_ctr_forward.6} parent=8 // pred_fallthru
          _
      $region9: #{memory_augmented_ctr_forward.6} parent=4 // pred_fallthru
        _
      %110 = vnop
    $region5: #{memory_augmented_ctr_forward.6} parent=1 // pred_fallthru
      _
    // Predicated region
    $region43: #{memory_augmented_ctr_forward.6} parent=1 // pred_check
      _
    $region44: #{memory_augmented_ctr_forward.6} parent=1 // pred_check_branch
      %112 = sbr.rel (0) target = $region46
    $region45: #{memory_augmented_ctr_forward.6} parent=1 // pred_region
      %s113 = scalar_lea.vmem %s1, 4
      // Predicated region
      $region47: #{memory_augmented_ctr_forward.6} parent=45 // pred_check
        _
      $region48: #{memory_augmented_ctr_forward.6} parent=45 // pred_check_branch
        %115 = sbr.rel (0) target = $region50
      $region49: #{memory_augmented_ctr_forward.6} parent=45 // pred_region
        // Predicated region
        $region51: #{memory_augmented_ctr_forward.6} parent=49 // pred_check
          _
        $region52: #{memory_augmented_ctr_forward.6} parent=49 // pred_check_branch
          %117 = sbr.rel target = $region54
        $region53: #{memory_augmented_ctr_forward.6} parent=49 // pred_region
          // Predicated region
          $region66: #{memory_augmented_ctr_forward.6} parent=53 // pred_check
            _
          $region67: #{memory_augmented_ctr_forward.6} parent=53 // pred_check_branch
            %163 = sbr.rel (0) target = $region69
          $region68: #{memory_augmented_ctr_forward.6} parent=53 // pred_region
            loop: start=0, step=1, limit=1
            $region70: #{memory_augmented_ctr_forward.6} parent=68 // loop_pre_header
              _
            $region71: #{memory_augmented_ctr_forward.6} parent=68 // loop_header
              %s165 = sphi 0, %s169
              %p166 = scmp.ge.s32.totalorder %s165, 1
              %s170 = sphi %s113, %s113
              %s171 = sphi [#allocation3], [#allocation3]
            $region72: #{memory_augmented_ctr_forward.6} parent=68 // loop_header_branch
              %168 = sbr.rel (%p166) target = $region76
            $region73: #{memory_augmented_ctr_forward.6} parent=68 // loop_body
              _
            $region74: #{memory_augmented_ctr_forward.6} parent=68 // loop_footer
              %s169 = sadd.s32 1, %s165
            $region75: #{memory_augmented_ctr_forward.6} parent=68 // loop_footer_branch
              %164 = sbr.rel target = $region71
            $region76: #{memory_augmented_ctr_forward.6} parent=68 // loop_exit
              _
            %s173 = ssub.s32 16, 1
            loop: start=0, step=1, limit=1
            $region77: #{memory_augmented_ctr_forward.6} parent=68 // loop_pre_header
              _
            $region78: #{memory_augmented_ctr_forward.6} parent=68 // loop_header
              %s175 = sphi 0, %s179
              %p176 = scmp.ge.s32.totalorder %s175, 1
              %s180 = sphi %s113, %s113
              %s181 = sphi [#allocation3], [#allocation3]
            $region79: #{memory_augmented_ctr_forward.6} parent=68 // loop_header_branch
              %178 = sbr.rel (%p176) target = $region83
            $region80: #{memory_augmented_ctr_forward.6} parent=68 // loop_body
              %v182 = vld [vmem:[%s180] sm:%s173]
              %183 = vst [vmem:[%s181] sm:%s173] %v182
              %v184 = vld [vmem:[%s180 + $0xc] sm:%s173]
              %185 = vst [vmem:[%s181 + $0x4] sm:%s173] %v184
              %v186 = vld [vmem:[%s180 + $0x18] sm:%s173]
              %187 = vst [vmem:[%s181 + $0x8] sm:%s173] %v186
              %v188 = vld [vmem:[%s180 + $0x24] sm:%s173]
              %189 = vst [vmem:[%s181 + $0xc] sm:%s173] %v188
              %v190 = vld [vmem:[%s180 + $0x30] sm:%s173]
              %191 = vst [vmem:[%s181 + $0x10] sm:%s173] %v190
              %v192 = vld [vmem:[%s180 + $0x3c] sm:%s173]
              %193 = vst [vmem:[%s181 + $0x14] sm:%s173] %v192
              %v194 = vld [vmem:[%s180 + $0x48] sm:%s173]
              %195 = vst [vmem:[%s181 + $0x18] sm:%s173] %v194
              %v196 = vld [vmem:[%s180 + $0x54] sm:%s173]
              %197 = vst [vmem:[%s181 + $0x1c] sm:%s173] %v196
              %v198 = vld [vmem:[%s180 + $0x60] sm:%s173]
              %199 = vst [vmem:[%s181 + $0x20] sm:%s173] %v198
              %v200 = vld [vmem:[%s180 + $0x6c] sm:%s173]
              %201 = vst [vmem:[%s181 + $0x24] sm:%s173] %v200
              %v202 = vld [vmem:[%s180 + $0x78] sm:%s173]
              %203 = vst [vmem:[%s181 + $0x28] sm:%s173] %v202
              %v204 = vld [vmem:[%s180 + $0x84] sm:%s173]
              %205 = vst [vmem:[%s181 + $0x2c] sm:%s173] %v204
              %v206 = vld [vmem:[%s180 + $0x90] sm:%s173]
              %207 = vst [vmem:[%s181 + $0x30] sm:%s173] %v206
              %v208 = vld [vmem:[%s180 + $0x9c] sm:%s173]
              %209 = vst [vmem:[%s181 + $0x34] sm:%s173] %v208
              %v210 = vld [vmem:[%s180 + $0xa8] sm:%s173]
              %211 = vst [vmem:[%s181 + $0x38] sm:%s173] %v210
              %v212 = vld [vmem:[%s180 + $0xb4] sm:%s173]
              %213 = vst [vmem:[%s181 + $0x3c] sm:%s173] %v212
            $region81: #{memory_augmented_ctr_forward.6} parent=68 // loop_footer
              %s179 = sadd.s32 1, %s175
            $region82: #{memory_augmented_ctr_forward.6} parent=68 // loop_footer_branch
              %174 = sbr.rel target = $region78
            $region83: #{memory_augmented_ctr_forward.6} parent=68 // loop_exit
              _
          $region69: #{memory_augmented_ctr_forward.6} parent=53 // pred_fallthru
            _
        $region54: #{memory_augmented_ctr_forward.6} parent=49 // pred_fallthru
          _
        // Predicated region
        $region55: #{memory_augmented_ctr_forward.6} parent=49 // pred_check
          _
        $region56: #{memory_augmented_ctr_forward.6} parent=49 // pred_check_branch
          %119 = sbr.rel (0) target = $region58
        $region57: #{memory_augmented_ctr_forward.6} parent=49 // pred_region
          %s121 = ssub.s32 16, 1
          loop: start=0, step=1, limit=1
          $region59: #{memory_augmented_ctr_forward.6} parent=57 // loop_pre_header
            _
          $region60: #{memory_augmented_ctr_forward.6} parent=57 // loop_header
            %s123 = sphi 0, %s127
            %p124 = scmp.ge.s32.totalorder %s123, 1
            %s128 = sphi %s113, %s113
            %s129 = sphi [#allocation3], [#allocation3]
          $region61: #{memory_augmented_ctr_forward.6} parent=57 // loop_header_branch
            %126 = sbr.rel (%p124) target = $region65
          $region62: #{memory_augmented_ctr_forward.6} parent=57 // loop_body
            %v130 = vld [vmem:[%s128] sm:%s121]
            %131 = vst [vmem:[%s129] sm:%s121] %v130
            %v132 = vld [vmem:[%s128 + $0xc] sm:%s121]
            %133 = vst [vmem:[%s129 + $0x4] sm:%s121] %v132
            %v134 = vld [vmem:[%s128 + $0x18] sm:%s121]
            %135 = vst [vmem:[%s129 + $0x8] sm:%s121] %v134
            %v136 = vld [vmem:[%s128 + $0x24] sm:%s121]
            %137 = vst [vmem:[%s129 + $0xc] sm:%s121] %v136
            %v138 = vld [vmem:[%s128 + $0x30] sm:%s121]
            %139 = vst [vmem:[%s129 + $0x10] sm:%s121] %v138
            %v140 = vld [vmem:[%s128 + $0x3c] sm:%s121]
            %141 = vst [vmem:[%s129 + $0x14] sm:%s121] %v140
            %v142 = vld [vmem:[%s128 + $0x48] sm:%s121]
            %143 = vst [vmem:[%s129 + $0x18] sm:%s121] %v142
            %v144 = vld [vmem:[%s128 + $0x54] sm:%s121]
            %145 = vst [vmem:[%s129 + $0x1c] sm:%s121] %v144
            %v146 = vld [vmem:[%s128 + $0x60] sm:%s121]
            %147 = vst [vmem:[%s129 + $0x20] sm:%s121] %v146
            %v148 = vld [vmem:[%s128 + $0x6c] sm:%s121]
            %149 = vst [vmem:[%s129 + $0x24] sm:%s121] %v148
            %v150 = vld [vmem:[%s128 + $0x78] sm:%s121]
            %151 = vst [vmem:[%s129 + $0x28] sm:%s121] %v150
            %v152 = vld [vmem:[%s128 + $0x84] sm:%s121]
            %153 = vst [vmem:[%s129 + $0x2c] sm:%s121] %v152
            %v154 = vld [vmem:[%s128 + $0x90] sm:%s121]
            %155 = vst [vmem:[%s129 + $0x30] sm:%s121] %v154
            %v156 = vld [vmem:[%s128 + $0x9c] sm:%s121]
            %157 = vst [vmem:[%s129 + $0x34] sm:%s121] %v156
            %v158 = vld [vmem:[%s128 + $0xa8] sm:%s121]
            %159 = vst [vmem:[%s129 + $0x38] sm:%s121] %v158
            %v160 = vld [vmem:[%s128 + $0xb4] sm:%s121]
            %161 = vst [vmem:[%s129 + $0x3c] sm:%s121] %v160
          $region63: #{memory_augmented_ctr_forward.6} parent=57 // loop_footer
            %s127 = sadd.s32 1, %s123
          $region64: #{memory_augmented_ctr_forward.6} parent=57 // loop_footer_branch
            %122 = sbr.rel target = $region60
          $region65: #{memory_augmented_ctr_forward.6} parent=57 // loop_exit
            _
        $region58: #{memory_augmented_ctr_forward.6} parent=49 // pred_fallthru
          _
      $region50: #{memory_augmented_ctr_forward.6} parent=45 // pred_fallthru
        _
      %214 = vnop
    $region46: #{memory_augmented_ctr_forward.6} parent=1 // pred_fallthru
      _
    // Predicated region
    $region84: #{memory_augmented_ctr_forward.6} parent=1 // pred_check
      _
    $region85: #{memory_augmented_ctr_forward.6} parent=1 // pred_check_branch
      %216 = sbr.rel (0) target = $region87
    $region86: #{memory_augmented_ctr_forward.6} parent=1 // pred_region
      %s217 = scalar_lea.vmem %s2, 8
      // Predicated region
      $region88: #{memory_augmented_ctr_forward.6} parent=86 // pred_check
        _
      $region89: #{memory_augmented_ctr_forward.6} parent=86 // pred_check_branch
        %219 = sbr.rel (0) target = $region91
      $region90: #{memory_augmented_ctr_forward.6} parent=86 // pred_region
        // Predicated region
        $region92: #{memory_augmented_ctr_forward.6} parent=90 // pred_check
          _
        $region93: #{memory_augmented_ctr_forward.6} parent=90 // pred_check_branch
          %221 = sbr.rel target = $region95
        $region94: #{memory_augmented_ctr_forward.6} parent=90 // pred_region
          // Predicated region
          $region107: #{memory_augmented_ctr_forward.6} parent=94 // pred_check
            _
          $region108: #{memory_augmented_ctr_forward.6} parent=94 // pred_check_branch
            %267 = sbr.rel (0) target = $region110
          $region109: #{memory_augmented_ctr_forward.6} parent=94 // pred_region
            loop: start=0, step=1, limit=1
            $region111: #{memory_augmented_ctr_forward.6} parent=109 // loop_pre_header
              _
            $region112: #{memory_augmented_ctr_forward.6} parent=109 // loop_header
              %s269 = sphi 0, %s273
              %p270 = scmp.ge.s32.totalorder %s269, 1
              %s274 = sphi %s217, %s217
              %s275 = sphi [#allocation4], [#allocation4]
            $region113: #{memory_augmented_ctr_forward.6} parent=109 // loop_header_branch
              %272 = sbr.rel (%p270) target = $region117
            $region114: #{memory_augmented_ctr_forward.6} parent=109 // loop_body
              _
            $region115: #{memory_augmented_ctr_forward.6} parent=109 // loop_footer
              %s273 = sadd.s32 1, %s269
            $region116: #{memory_augmented_ctr_forward.6} parent=109 // loop_footer_branch
              %268 = sbr.rel target = $region112
            $region117: #{memory_augmented_ctr_forward.6} parent=109 // loop_exit
              _
            %s277 = ssub.s32 16, 1
            loop: start=0, step=1, limit=1
            $region118: #{memory_augmented_ctr_forward.6} parent=109 // loop_pre_header
              _
            $region119: #{memory_augmented_ctr_forward.6} parent=109 // loop_header
              %s279 = sphi 0, %s283
              %p280 = scmp.ge.s32.totalorder %s279, 1
              %s284 = sphi %s217, %s217
              %s285 = sphi [#allocation4], [#allocation4]
            $region120: #{memory_augmented_ctr_forward.6} parent=109 // loop_header_branch
              %282 = sbr.rel (%p280) target = $region124
            $region121: #{memory_augmented_ctr_forward.6} parent=109 // loop_body
              %v286 = vld [vmem:[%s284] sm:%s277]
              %287 = vst [vmem:[%s285] sm:%s277] %v286
              %v288 = vld [vmem:[%s284 + $0xc] sm:%s277]
              %289 = vst [vmem:[%s285 + $0x4] sm:%s277] %v288
              %v290 = vld [vmem:[%s284 + $0x18] sm:%s277]
              %291 = vst [vmem:[%s285 + $0x8] sm:%s277] %v290
              %v292 = vld [vmem:[%s284 + $0x24] sm:%s277]
              %293 = vst [vmem:[%s285 + $0xc] sm:%s277] %v292
              %v294 = vld [vmem:[%s284 + $0x30] sm:%s277]
              %295 = vst [vmem:[%s285 + $0x10] sm:%s277] %v294
              %v296 = vld [vmem:[%s284 + $0x3c] sm:%s277]
              %297 = vst [vmem:[%s285 + $0x14] sm:%s277] %v296
              %v298 = vld [vmem:[%s284 + $0x48] sm:%s277]
              %299 = vst [vmem:[%s285 + $0x18] sm:%s277] %v298
              %v300 = vld [vmem:[%s284 + $0x54] sm:%s277]
              %301 = vst [vmem:[%s285 + $0x1c] sm:%s277] %v300
              %v302 = vld [vmem:[%s284 + $0x60] sm:%s277]
              %303 = vst [vmem:[%s285 + $0x20] sm:%s277] %v302
              %v304 = vld [vmem:[%s284 + $0x6c] sm:%s277]
              %305 = vst [vmem:[%s285 + $0x24] sm:%s277] %v304
              %v306 = vld [vmem:[%s284 + $0x78] sm:%s277]
              %307 = vst [vmem:[%s285 + $0x28] sm:%s277] %v306
              %v308 = vld [vmem:[%s284 + $0x84] sm:%s277]
              %309 = vst [vmem:[%s285 + $0x2c] sm:%s277] %v308
              %v310 = vld [vmem:[%s284 + $0x90] sm:%s277]
              %311 = vst [vmem:[%s285 + $0x30] sm:%s277] %v310
              %v312 = vld [vmem:[%s284 + $0x9c] sm:%s277]
              %313 = vst [vmem:[%s285 + $0x34] sm:%s277] %v312
              %v314 = vld [vmem:[%s284 + $0xa8] sm:%s277]
              %315 = vst [vmem:[%s285 + $0x38] sm:%s277] %v314
              %v316 = vld [vmem:[%s284 + $0xb4] sm:%s277]
              %317 = vst [vmem:[%s285 + $0x3c] sm:%s277] %v316
            $region122: #{memory_augmented_ctr_forward.6} parent=109 // loop_footer
              %s283 = sadd.s32 1, %s279
            $region123: #{memory_augmented_ctr_forward.6} parent=109 // loop_footer_branch
              %278 = sbr.rel target = $region119
            $region124: #{memory_augmented_ctr_forward.6} parent=109 // loop_exit
              _
          $region110: #{memory_augmented_ctr_forward.6} parent=94 // pred_fallthru
            _
        $region95: #{memory_augmented_ctr_forward.6} parent=90 // pred_fallthru
          _
        // Predicated region
        $region96: #{memory_augmented_ctr_forward.6} parent=90 // pred_check
          _
        $region97: #{memory_augmented_ctr_forward.6} parent=90 // pred_check_branch
          %223 = sbr.rel (0) target = $region99
        $region98: #{memory_augmented_ctr_forward.6} parent=90 // pred_region
          %s225 = ssub.s32 16, 1
          loop: start=0, step=1, limit=1
          $region100: #{memory_augmented_ctr_forward.6} parent=98 // loop_pre_header
            _
          $region101: #{memory_augmented_ctr_forward.6} parent=98 // loop_header
            %s227 = sphi 0, %s231
            %p228 = scmp.ge.s32.totalorder %s227, 1
            %s232 = sphi %s217, %s217
            %s233 = sphi [#allocation4], [#allocation4]
          $region102: #{memory_augmented_ctr_forward.6} parent=98 // loop_header_branch
            %230 = sbr.rel (%p228) target = $region106
          $region103: #{memory_augmented_ctr_forward.6} parent=98 // loop_body
            %v234 = vld [vmem:[%s232] sm:%s225]
            %235 = vst [vmem:[%s233] sm:%s225] %v234
            %v236 = vld [vmem:[%s232 + $0xc] sm:%s225]
            %237 = vst [vmem:[%s233 + $0x4] sm:%s225] %v236
            %v238 = vld [vmem:[%s232 + $0x18] sm:%s225]
            %239 = vst [vmem:[%s233 + $0x8] sm:%s225] %v238
            %v240 = vld [vmem:[%s232 + $0x24] sm:%s225]
            %241 = vst [vmem:[%s233 + $0xc] sm:%s225] %v240
            %v242 = vld [vmem:[%s232 + $0x30] sm:%s225]
            %243 = vst [vmem:[%s233 + $0x10] sm:%s225] %v242
            %v244 = vld [vmem:[%s232 + $0x3c] sm:%s225]
            %245 = vst [vmem:[%s233 + $0x14] sm:%s225] %v244
            %v246 = vld [vmem:[%s232 + $0x48] sm:%s225]
            %247 = vst [vmem:[%s233 + $0x18] sm:%s225] %v246
            %v248 = vld [vmem:[%s232 + $0x54] sm:%s225]
            %249 = vst [vmem:[%s233 + $0x1c] sm:%s225] %v248
            %v250 = vld [vmem:[%s232 + $0x60] sm:%s225]
            %251 = vst [vmem:[%s233 + $0x20] sm:%s225] %v250
            %v252 = vld [vmem:[%s232 + $0x6c] sm:%s225]
            %253 = vst [vmem:[%s233 + $0x24] sm:%s225] %v252
            %v254 = vld [vmem:[%s232 + $0x78] sm:%s225]
            %255 = vst [vmem:[%s233 + $0x28] sm:%s225] %v254
            %v256 = vld [vmem:[%s232 + $0x84] sm:%s225]
            %257 = vst [vmem:[%s233 + $0x2c] sm:%s225] %v256
            %v258 = vld [vmem:[%s232 + $0x90] sm:%s225]
            %259 = vst [vmem:[%s233 + $0x30] sm:%s225] %v258
            %v260 = vld [vmem:[%s232 + $0x9c] sm:%s225]
            %261 = vst [vmem:[%s233 + $0x34] sm:%s225] %v260
            %v262 = vld [vmem:[%s232 + $0xa8] sm:%s225]
            %263 = vst [vmem:[%s233 + $0x38] sm:%s225] %v262
            %v264 = vld [vmem:[%s232 + $0xb4] sm:%s225]
            %265 = vst [vmem:[%s233 + $0x3c] sm:%s225] %v264
          $region104: #{memory_augmented_ctr_forward.6} parent=98 // loop_footer
            %s231 = sadd.s32 1, %s227
          $region105: #{memory_augmented_ctr_forward.6} parent=98 // loop_footer_branch
            %226 = sbr.rel target = $region101
          $region106: #{memory_augmented_ctr_forward.6} parent=98 // loop_exit
            _
        $region99: #{memory_augmented_ctr_forward.6} parent=90 // pred_fallthru
          _
      $region91: #{memory_augmented_ctr_forward.6} parent=86 // pred_fallthru
        _
      %318 = vnop
    $region87: #{memory_augmented_ctr_forward.6} parent=1 // pred_fallthru
      _
    // Predicated region
    $region125: #{memory_augmented_ctr_forward.6} parent=1 // pred_check
      _
    $region126: #{memory_augmented_ctr_forward.6} parent=1 // pred_check_branch
      %320 = sbr.rel (0) target = $region128
    $region127: #{memory_augmented_ctr_forward.6} parent=1 // pred_region
      _
    $region128: #{memory_augmented_ctr_forward.6} parent=1 // pred_fallthru
      _
    // Predicated region
    $region129: #{memory_augmented_ctr_forward.6} parent=1 // pred_check
      _
    $region130: #{memory_augmented_ctr_forward.6} parent=1 // pred_check_branch
      %322 = sbr.rel (0) target = $region132
    $region131: #{memory_augmented_ctr_forward.6} parent=1 // pred_region
      _
    $region132: #{memory_augmented_ctr_forward.6} parent=1 // pred_fallthru
      _
    // Predicated region
    $region133: #{memory_augmented_ctr_forward.6} parent=1 // pred_check
      _
    $region134: #{memory_augmented_ctr_forward.6} parent=1 // pred_check_branch
      %324 = sbr.rel (0) target = $region136
    $region135: #{memory_augmented_ctr_forward.6} parent=1 // pred_region
      _
    $region136: #{memory_augmented_ctr_forward.6} parent=1 // pred_fallthru
      _
    %v325 = vld [vmem:[#allocation2] sm:$0x1]
    %v326 = vld [vmem:[#allocation2 + $0x8] sm:$0x1]
    %v327 = vld [vmem:[#allocation2 + $0x10] sm:$0x1]
    %v328 = vld [vmem:[#allocation2 + $0x18] sm:$0x1]
    %v329 = vld [vmem:[#allocation2 + $0x20] sm:$0x1]
    %v330 = vld [vmem:[#allocation2 + $0x28] sm:$0x1]
    %v331 = vld [vmem:[#allocation2 + $0x30] sm:$0x1]
    %v332 = vld [vmem:[#allocation2 + $0x38] sm:$0x1]
    %v333 = vmul.f32 %v325, 0.35355338
    %v334 = vmul.f32 %v326, 0.35355338
    %v335 = vmul.f32 %v327, 0.35355338
    %v336 = vmul.f32 %v328, 0.35355338
    %v337 = vmul.f32 %v329, 0.35355338
    %v338 = vmul.f32 %v330, 0.35355338
    %v339 = vmul.f32 %v331, 0.35355338
    %v340 = vmul.f32 %v332, 0.35355338
    %v341 = vld [vmem:[#allocation3] sm:$0x1]
    %v342 = vld [vmem:[#allocation3 + $0x8] sm:$0x1]
    %v343 = vld [vmem:[#allocation3 + $0x10] sm:$0x1]
    %v344 = vld [vmem:[#allocation3 + $0x18] sm:$0x1]
    %v345 = vld [vmem:[#allocation3 + $0x20] sm:$0x1]
    %v346 = vld [vmem:[#allocation3 + $0x28] sm:$0x1]
    %v347 = vld [vmem:[#allocation3 + $0x30] sm:$0x1]
    %v348 = vld [vmem:[#allocation3 + $0x38] sm:$0x1]
    %v349 = vld [vmem:[#allocation4] sm:$0x1]
    %v350 = vld [vmem:[#allocation4 + $0x8] sm:$0x1]
    %v351 = vld [vmem:[#allocation4 + $0x10] sm:$0x1]
    %v352 = vld [vmem:[#allocation4 + $0x18] sm:$0x1]
    %v353 = vld [vmem:[#allocation4 + $0x20] sm:$0x1]
    %v354 = vld [vmem:[#allocation4 + $0x28] sm:$0x1]
    %v355 = vld [vmem:[#allocation4 + $0x30] sm:$0x1]
    %v356 = vld [vmem:[#allocation4 + $0x38] sm:$0x1]
    %v365 = vrot.slane %v334, 7
    %vm366 = vcmask 1041409
    %v367 = vsel %vm366, %v365, %v333
    %v368 = vrot.slane %v335, 6
    %vm369 = vcmask 1042434
    %v370 = vsel %vm369, %v368, %v367
    %v371 = vrot.slane %v336, 5
    %vm372 = vcmask 1043459
    %v373 = vsel %vm372, %v371, %v370
    %v374 = vrot.slane %v337, 4
    %vm375 = vcmask 1044484
    %v376 = vsel %vm375, %v374, %v373
    %v377 = vrot.slane %v338, 3
    %vm378 = vcmask 1045509
    %v379 = vsel %vm378, %v377, %v376
    %v380 = vrot.slane %v339, 2
    %vm381 = vcmask 1046534
    %v382 = vsel %vm381, %v380, %v379
    %v383 = vrot.slane %v340, 1
    %vm384 = vcmask 1047559
    %v385 = vsel %vm384, %v383, %v382
    %v394 = vrot.slane %v342, 7
    %v395 = vsel %vm366, %v394, %v341
    %v396 = vrot.slane %v343, 6
    %v397 = vsel %vm369, %v396, %v395
    %v398 = vrot.slane %v344, 5
    %v399 = vsel %vm372, %v398, %v397
    %v400 = vrot.slane %v345, 4
    %v401 = vsel %vm375, %v400, %v399
    %v402 = vrot.slane %v346, 3
    %v403 = vsel %vm378, %v402, %v401
    %v404 = vrot.slane %v347, 2
    %v405 = vsel %vm381, %v404, %v403
    %v406 = vrot.slane %v348, 1
    %v407 = vsel %vm384, %v406, %v405
    %vm408 = vcmask 64512
    %v409 = vsel %vm408, %v385, 0
    %v411 = vsel %vm408, %v407, 0
    %413 = vmatpush.xpose.msra.mxu0 0.0
    %414 = vmatpush.xpose.msra.mxu0 0.0
    %415 = vmatpush.xpose.msra.mxu0 0.0
    %416 = vmatpush.xpose.msra.mxu0 0.0
    %417 = vmatpush.xpose.msra.mxu0 0.0
    %418 = vmatpush.xpose.msra.mxu0 0.0
    %419 = vmatpush.xpose.msra.mxu0 0.0
    %420 = vmatpush.xpose.msra.mxu0 0.0
    %421 = vmatpush.xpose.msra.mxu0 0.0
    %422 = vmatpush.xpose.msra.mxu0 0.0
    %423 = vmatpush.xpose.msra.mxu0 0.0
    %424 = vmatpush.xpose.msra.mxu0 0.0
    %425 = vmatpush.xpose.msra.mxu0 0.0
    %426 = vmatpush.xpose.msra.mxu0 0.0
    %427 = vmatpush.xpose.msra.mxu0 0.0
    %428 = vmatpush.xpose.msra.mxu0 %v411
    %429 = vmatmul.f32.gmra.mxu0 %v409
    %v430 = vpop.f32.mrf.mxu0
    %v431 = vadd.f32 0.0, %v430
    %432 = vdwg.mxu0
    %v433 = vsel %vm408, %v431, -inf
    %434 = vmax.xlane.f32.xlu0 %v433
    %v435 = vpop.xlane.xlu0 %434
    %v436 = vsub.f32 %v431, %v435
    %v437 = vmul.f32 %v436, 1.442695
    %v438 = vpow.pop %v437
    %v439 = vsel %vm408, %v438, 0.0
    %440 = vadd.xlane.f32.xlu0 %v439
    %v441 = vpop.xlane.xlu0 %440
    %v442 = vrcp.pop %v441
    %v443 = vmul.f32 %v438, %v442
    %v452 = vrot.slane %v350, 7
    %v453 = vsel %vm366, %v452, %v349
    %v454 = vrot.slane %v351, 6
    %v455 = vsel %vm369, %v454, %v453
    %v456 = vrot.slane %v352, 5
    %v457 = vsel %vm372, %v456, %v455
    %v458 = vrot.slane %v353, 4
    %v459 = vsel %vm375, %v458, %v457
    %v460 = vrot.slane %v354, 3
    %v461 = vsel %vm378, %v460, %v459
    %v462 = vrot.slane %v355, 2
    %v463 = vsel %vm381, %v462, %v461
    %v464 = vrot.slane %v356, 1
    %v465 = vsel %vm384, %v464, %v463
    %v468 = vsel %vm408, %v443, 0
    %470 = vmatpush.msra.mxu0 0.0
    %471 = vmatpush.msra.mxu0 0.0
    %472 = vmatpush.msra.mxu0 0.0
    %473 = vmatpush.msra.mxu0 0.0
    %474 = vmatpush.msra.mxu0 0.0
    %475 = vmatpush.msra.mxu0 0.0
    %476 = vmatpush.msra.mxu0 0.0
    %477 = vmatpush.msra.mxu0 0.0
    %478 = vmatpush.msra.mxu0 0.0
    %479 = vmatpush.msra.mxu0 0.0
    %480 = vmatpush.msra.mxu0 0.0
    %481 = vmatpush.msra.mxu0 0.0
    %482 = vmatpush.msra.mxu0 0.0
    %483 = vmatpush.msra.mxu0 0.0
    %484 = vmatpush.msra.mxu0 0.0
    %485 = vmatpush.msra.mxu0 %v465
    %486 = vmatmul.f32.gmra.mxu0 %v468
    %v487 = vpop.f32.mrf.mxu0
    %v488 = vadd.f32 0.0, %v487
    %489 = vdwg.mxu0
    %v490 = vld [vmem:[#allocation2 + $0x1] sm:$0x1]
    %v491 = vld [vmem:[#allocation2 + $0x9] sm:$0x1]
    %v492 = vld [vmem:[#allocation2 + $0x11] sm:$0x1]
    %v493 = vld [vmem:[#allocation2 + $0x19] sm:$0x1]
    %v494 = vld [vmem:[#allocation2 + $0x21] sm:$0x1]
    %v495 = vld [vmem:[#allocation2 + $0x29] sm:$0x1]
    %v496 = vld [vmem:[#allocation2 + $0x31] sm:$0x1]
    %v497 = vld [vmem:[#allocation2 + $0x39] sm:$0x1]
    %v498 = vmul.f32 %v490, 0.35355338
    %v499 = vmul.f32 %v491, 0.35355338
    %v500 = vmul.f32 %v492, 0.35355338
    %v501 = vmul.f32 %v493, 0.35355338
    %v502 = vmul.f32 %v494, 0.35355338
    %v503 = vmul.f32 %v495, 0.35355338
    %v504 = vmul.f32 %v496, 0.35355338
    %v505 = vmul.f32 %v497, 0.35355338
    %v506 = vld [vmem:[#allocation3 + $0x1] sm:$0x1]
    %v507 = vld [vmem:[#allocation3 + $0x9] sm:$0x1]
    %v508 = vld [vmem:[#allocation3 + $0x11] sm:$0x1]
    %v509 = vld [vmem:[#allocation3 + $0x19] sm:$0x1]
    %v510 = vld [vmem:[#allocation3 + $0x21] sm:$0x1]
    %v511 = vld [vmem:[#allocation3 + $0x29] sm:$0x1]
    %v512 = vld [vmem:[#allocation3 + $0x31] sm:$0x1]
    %v513 = vld [vmem:[#allocation3 + $0x39] sm:$0x1]
    %v514 = vld [vmem:[#allocation4 + $0x1] sm:$0x1]
    %v515 = vld [vmem:[#allocation4 + $0x9] sm:$0x1]
    %v516 = vld [vmem:[#allocation4 + $0x11] sm:$0x1]
    %v517 = vld [vmem:[#allocation4 + $0x19] sm:$0x1]
    %v518 = vld [vmem:[#allocation4 + $0x21] sm:$0x1]
    %v519 = vld [vmem:[#allocation4 + $0x29] sm:$0x1]
    %v520 = vld [vmem:[#allocation4 + $0x31] sm:$0x1]
    %v521 = vld [vmem:[#allocation4 + $0x39] sm:$0x1]
    %v530 = vrot.slane %v499, 7
    %v531 = vsel %vm366, %v530, %v498
    %v532 = vrot.slane %v500, 6
    %v533 = vsel %vm369, %v532, %v531
    %v534 = vrot.slane %v501, 5
    %v535 = vsel %vm372, %v534, %v533
    %v536 = vrot.slane %v502, 4
    %v537 = vsel %vm375, %v536, %v535
    %v538 = vrot.slane %v503, 3
    %v539 = vsel %vm378, %v538, %v537
    %v540 = vrot.slane %v504, 2
    %v541 = vsel %vm381, %v540, %v539
    %v542 = vrot.slane %v505, 1
    %v543 = vsel %vm384, %v542, %v541
    %v552 = vrot.slane %v507, 7
    %v553 = vsel %vm366, %v552, %v506
    %v554 = vrot.slane %v508, 6
    %v555 = vsel %vm369, %v554, %v553
    %v556 = vrot.slane %v509, 5
    %v557 = vsel %vm372, %v556, %v555
    %v558 = vrot.slane %v510, 4
    %v559 = vsel %vm375, %v558, %v557
    %v560 = vrot.slane %v511, 3
    %v561 = vsel %vm378, %v560, %v559
    %v562 = vrot.slane %v512, 2
    %v563 = vsel %vm381, %v562, %v561
    %v564 = vrot.slane %v513, 1
    %v565 = vsel %vm384, %v564, %v563
    %v566 = vsel %vm408, %v543, 0
    %v568 = vsel %vm408, %v565, 0
    %570 = vmatpush.xpose.msra.mxu0 0.0
    %571 = vmatpush.xpose.msra.mxu0 0.0
    %572 = vmatpush.xpose.msra.mxu0 0.0
    %573 = vmatpush.xpose.msra.mxu0 0.0
    %574 = vmatpush.xpose.msra.mxu0 0.0
    %575 = vmatpush.xpose.msra.mxu0 0.0
    %576 = vmatpush.xpose.msra.mxu0 0.0
    %577 = vmatpush.xpose.msra.mxu0 0.0
    %578 = vmatpush.xpose.msra.mxu0 0.0
    %579 = vmatpush.xpose.msra.mxu0 0.0
    %580 = vmatpush.xpose.msra.mxu0 0.0
    %581 = vmatpush.xpose.msra.mxu0 0.0
    %582 = vmatpush.xpose.msra.mxu0 0.0
    %583 = vmatpush.xpose.msra.mxu0 0.0
    %584 = vmatpush.xpose.msra.mxu0 0.0
    %585 = vmatpush.xpose.msra.mxu0 %v568
    %586 = vmatmul.f32.gmra.mxu0 %v566
    %v587 = vpop.f32.mrf.mxu0
    %v588 = vadd.f32 0.0, %v587
    %589 = vdwg.mxu0
    %v590 = vsel %vm408, %v588, -inf
    %591 = vmax.xlane.f32.xlu0 %v590
    %v592 = vpop.xlane.xlu0 %591
    %v593 = vsub.f32 %v588, %v592
    %v594 = vmul.f32 %v593, 1.442695
    %v595 = vpow.pop %v594
    %v596 = vsel %vm408, %v595, 0.0
    %597 = vadd.xlane.f32.xlu0 %v596
    %v598 = vpop.xlane.xlu0 %597
    %v599 = vrcp.pop %v598
    %v600 = vmul.f32 %v595, %v599
    %v609 = vrot.slane %v515, 7
    %v610 = vsel %vm366, %v609, %v514
    %v611 = vrot.slane %v516, 6
    %v612 = vsel %vm369, %v611, %v610
    %v613 = vrot.slane %v517, 5
    %v614 = vsel %vm372, %v613, %v612
    %v615 = vrot.slane %v518, 4
    %v616 = vsel %vm375, %v615, %v614
    %v617 = vrot.slane %v519, 3
    %v618 = vsel %vm378, %v617, %v616
    %v619 = vrot.slane %v520, 2
    %v620 = vsel %vm381, %v619, %v618
    %v621 = vrot.slane %v521, 1
    %v622 = vsel %vm384, %v621, %v620
    %v625 = vsel %vm408, %v600, 0
    %627 = vmatpush.msra.mxu0 0.0
    %628 = vmatpush.msra.mxu0 0.0
    %629 = vmatpush.msra.mxu0 0.0
    %630 = vmatpush.msra.mxu0 0.0
    %631 = vmatpush.msra.mxu0 0.0
    %632 = vmatpush.msra.mxu0 0.0
    %633 = vmatpush.msra.mxu0 0.0
    %634 = vmatpush.msra.mxu0 0.0
    %635 = vmatpush.msra.mxu0 0.0
    %636 = vmatpush.msra.mxu0 0.0
    %637 = vmatpush.msra.mxu0 0.0
    %638 = vmatpush.msra.mxu0 0.0
    %639 = vmatpush.msra.mxu0 0.0
    %640 = vmatpush.msra.mxu0 0.0
    %641 = vmatpush.msra.mxu0 0.0
    %642 = vmatpush.msra.mxu0 %v622
    %643 = vmatmul.f32.gmra.mxu0 %v625
    %v644 = vpop.f32.mrf.mxu0
    %v645 = vadd.f32 0.0, %v644
    %646 = vdwg.mxu0
    %v647 = vld [vmem:[#allocation2 + $0x2] sm:$0x1]
    %v648 = vld [vmem:[#allocation2 + $0xa] sm:$0x1]
    %v649 = vld [vmem:[#allocation2 + $0x12] sm:$0x1]
    %v650 = vld [vmem:[#allocation2 + $0x1a] sm:$0x1]
    %v651 = vld [vmem:[#allocation2 + $0x22] sm:$0x1]
    %v652 = vld [vmem:[#allocation2 + $0x2a] sm:$0x1]
    %v653 = vld [vmem:[#allocation2 + $0x32] sm:$0x1]
    %v654 = vld [vmem:[#allocation2 + $0x3a] sm:$0x1]
    %v655 = vmul.f32 %v647, 0.35355338
    %v656 = vmul.f32 %v648, 0.35355338
    %v657 = vmul.f32 %v649, 0.35355338
    %v658 = vmul.f32 %v650, 0.35355338
    %v659 = vmul.f32 %v651, 0.35355338
    %v660 = vmul.f32 %v652, 0.35355338
    %v661 = vmul.f32 %v653, 0.35355338
    %v662 = vmul.f32 %v654, 0.35355338
    %v663 = vld [vmem:[#allocation3 + $0x2] sm:$0x1]
    %v664 = vld [vmem:[#allocation3 + $0xa] sm:$0x1]
    %v665 = vld [vmem:[#allocation3 + $0x12] sm:$0x1]
    %v666 = vld [vmem:[#allocation3 + $0x1a] sm:$0x1]
    %v667 = vld [vmem:[#allocation3 + $0x22] sm:$0x1]
    %v668 = vld [vmem:[#allocation3 + $0x2a] sm:$0x1]
    %v669 = vld [vmem:[#allocation3 + $0x32] sm:$0x1]
    %v670 = vld [vmem:[#allocation3 + $0x3a] sm:$0x1]
    %v671 = vld [vmem:[#allocation4 + $0x2] sm:$0x1]
    %v672 = vld [vmem:[#allocation4 + $0xa] sm:$0x1]
    %v673 = vld [vmem:[#allocation4 + $0x12] sm:$0x1]
    %v674 = vld [vmem:[#allocation4 + $0x1a] sm:$0x1]
    %v675 = vld [vmem:[#allocation4 + $0x22] sm:$0x1]
    %v676 = vld [vmem:[#allocation4 + $0x2a] sm:$0x1]
    %v677 = vld [vmem:[#allocation4 + $0x32] sm:$0x1]
    %v678 = vld [vmem:[#allocation4 + $0x3a] sm:$0x1]
    %v687 = vrot.slane %v656, 7
    %v688 = vsel %vm366, %v687, %v655
    %v689 = vrot.slane %v657, 6
    %v690 = vsel %vm369, %v689, %v688
    %v691 = vrot.slane %v658, 5
    %v692 = vsel %vm372, %v691, %v690
    %v693 = vrot.slane %v659, 4
    %v694 = vsel %vm375, %v693, %v692
    %v695 = vrot.slane %v660, 3
    %v696 = vsel %vm378, %v695, %v694
    %v697 = vrot.slane %v661, 2
    %v698 = vsel %vm381, %v697, %v696
    %v699 = vrot.slane %v662, 1
    %v700 = vsel %vm384, %v699, %v698
    %v709 = vrot.slane %v664, 7
    %v710 = vsel %vm366, %v709, %v663
    %v711 = vrot.slane %v665, 6
    %v712 = vsel %vm369, %v711, %v710
    %v713 = vrot.slane %v666, 5
    %v714 = vsel %vm372, %v713, %v712
    %v715 = vrot.slane %v667, 4
    %v716 = vsel %vm375, %v715, %v714
    %v717 = vrot.slane %v668, 3
    %v718 = vsel %vm378, %v717, %v716
    %v719 = vrot.slane %v669, 2
    %v720 = vsel %vm381, %v719, %v718
    %v721 = vrot.slane %v670, 1
    %v722 = vsel %vm384, %v721, %v720
    %v723 = vsel %vm408, %v700, 0
    %v725 = vsel %vm408, %v722, 0
    %727 = vmatpush.xpose.msra.mxu0 0.0
    %728 = vmatpush.xpose.msra.mxu0 0.0
    %729 = vmatpush.xpose.msra.mxu0 0.0
    %730 = vmatpush.xpose.msra.mxu0 0.0
    %731 = vmatpush.xpose.msra.mxu0 0.0
    %732 = vmatpush.xpose.msra.mxu0 0.0
    %733 = vmatpush.xpose.msra.mxu0 0.0
    %734 = vmatpush.xpose.msra.mxu0 0.0
    %735 = vmatpush.xpose.msra.mxu0 0.0
    %736 = vmatpush.xpose.msra.mxu0 0.0
    %737 = vmatpush.xpose.msra.mxu0 0.0
    %738 = vmatpush.xpose.msra.mxu0 0.0
    %739 = vmatpush.xpose.msra.mxu0 0.0
    %740 = vmatpush.xpose.msra.mxu0 0.0
    %741 = vmatpush.xpose.msra.mxu0 0.0
    %742 = vmatpush.xpose.msra.mxu0 %v725
    %743 = vmatmul.f32.gmra.mxu0 %v723
    %v744 = vpop.f32.mrf.mxu0
    %v745 = vadd.f32 0.0, %v744
    %746 = vdwg.mxu0
    %v747 = vsel %vm408, %v745, -inf
    %748 = vmax.xlane.f32.xlu0 %v747
    %v749 = vpop.xlane.xlu0 %748
    %v750 = vsub.f32 %v745, %v749
    %v751 = vmul.f32 %v750, 1.442695
    %v752 = vpow.pop %v751
    %v753 = vsel %vm408, %v752, 0.0
    %754 = vadd.xlane.f32.xlu0 %v753
    %v755 = vpop.xlane.xlu0 %754
    %v756 = vrcp.pop %v755
    %v757 = vmul.f32 %v752, %v756
    %v766 = vrot.slane %v672, 7
    %v767 = vsel %vm366, %v766, %v671
    %v768 = vrot.slane %v673, 6
    %v769 = vsel %vm369, %v768, %v767
    %v770 = vrot.slane %v674, 5
    %v771 = vsel %vm372, %v770, %v769
    %v772 = vrot.slane %v675, 4
    %v773 = vsel %vm375, %v772, %v771
    %v774 = vrot.slane %v676, 3
    %v775 = vsel %vm378, %v774, %v773
    %v776 = vrot.slane %v677, 2
    %v777 = vsel %vm381, %v776, %v775
    %v778 = vrot.slane %v678, 1
    %v779 = vsel %vm384, %v778, %v777
    %v782 = vsel %vm408, %v757, 0
    %784 = vmatpush.msra.mxu0 0.0
    %785 = vmatpush.msra.mxu0 0.0
    %786 = vmatpush.msra.mxu0 0.0
    %787 = vmatpush.msra.mxu0 0.0
    %788 = vmatpush.msra.mxu0 0.0
    %789 = vmatpush.msra.mxu0 0.0
    %790 = vmatpush.msra.mxu0 0.0
    %791 = vmatpush.msra.mxu0 0.0
    %792 = vmatpush.msra.mxu0 0.0
    %793 = vmatpush.msra.mxu0 0.0
    %794 = vmatpush.msra.mxu0 0.0
    %795 = vmatpush.msra.mxu0 0.0
    %796 = vmatpush.msra.mxu0 0.0
    %797 = vmatpush.msra.mxu0 0.0
    %798 = vmatpush.msra.mxu0 0.0
    %799 = vmatpush.msra.mxu0 %v779
    %800 = vmatmul.f32.gmra.mxu0 %v782
    %v801 = vpop.f32.mrf.mxu0
    %v802 = vadd.f32 0.0, %v801
    %803 = vdwg.mxu0
    %v804 = vld [vmem:[#allocation2 + $0x3] sm:$0x1]
    %v805 = vld [vmem:[#allocation2 + $0xb] sm:$0x1]
    %v806 = vld [vmem:[#allocation2 + $0x13] sm:$0x1]
    %v807 = vld [vmem:[#allocation2 + $0x1b] sm:$0x1]
    %v808 = vld [vmem:[#allocation2 + $0x23] sm:$0x1]
    %v809 = vld [vmem:[#allocation2 + $0x2b] sm:$0x1]
    %v810 = vld [vmem:[#allocation2 + $0x33] sm:$0x1]
    %v811 = vld [vmem:[#allocation2 + $0x3b] sm:$0x1]
    %v812 = vmul.f32 %v804, 0.35355338
    %v813 = vmul.f32 %v805, 0.35355338
    %v814 = vmul.f32 %v806, 0.35355338
    %v815 = vmul.f32 %v807, 0.35355338
    %v816 = vmul.f32 %v808, 0.35355338
    %v817 = vmul.f32 %v809, 0.35355338
    %v818 = vmul.f32 %v810, 0.35355338
    %v819 = vmul.f32 %v811, 0.35355338
    %v820 = vld [vmem:[#allocation3 + $0x3] sm:$0x1]
    %v821 = vld [vmem:[#allocation3 + $0xb] sm:$0x1]
    %v822 = vld [vmem:[#allocation3 + $0x13] sm:$0x1]
    %v823 = vld [vmem:[#allocation3 + $0x1b] sm:$0x1]
    %v824 = vld [vmem:[#allocation3 + $0x23] sm:$0x1]
    %v825 = vld [vmem:[#allocation3 + $0x2b] sm:$0x1]
    %v826 = vld [vmem:[#allocation3 + $0x33] sm:$0x1]
    %v827 = vld [vmem:[#allocation3 + $0x3b] sm:$0x1]
    %v828 = vld [vmem:[#allocation4 + $0x3] sm:$0x1]
    %v829 = vld [vmem:[#allocation4 + $0xb] sm:$0x1]
    %v830 = vld [vmem:[#allocation4 + $0x13] sm:$0x1]
    %v831 = vld [vmem:[#allocation4 + $0x1b] sm:$0x1]
    %v832 = vld [vmem:[#allocation4 + $0x23] sm:$0x1]
    %v833 = vld [vmem:[#allocation4 + $0x2b] sm:$0x1]
    %v834 = vld [vmem:[#allocation4 + $0x33] sm:$0x1]
    %v835 = vld [vmem:[#allocation4 + $0x3b] sm:$0x1]
    %v844 = vrot.slane %v813, 7
    %v845 = vsel %vm366, %v844, %v812
    %v846 = vrot.slane %v814, 6
    %v847 = vsel %vm369, %v846, %v845
    %v848 = vrot.slane %v815, 5
    %v849 = vsel %vm372, %v848, %v847
    %v850 = vrot.slane %v816, 4
    %v851 = vsel %vm375, %v850, %v849
    %v852 = vrot.slane %v817, 3
    %v853 = vsel %vm378, %v852, %v851
    %v854 = vrot.slane %v818, 2
    %v855 = vsel %vm381, %v854, %v853
    %v856 = vrot.slane %v819, 1
    %v857 = vsel %vm384, %v856, %v855
    %v866 = vrot.slane %v821, 7
    %v867 = vsel %vm366, %v866, %v820
    %v868 = vrot.slane %v822, 6
    %v869 = vsel %vm369, %v868, %v867
    %v870 = vrot.slane %v823, 5
    %v871 = vsel %vm372, %v870, %v869
    %v872 = vrot.slane %v824, 4
    %v873 = vsel %vm375, %v872, %v871
    %v874 = vrot.slane %v825, 3
    %v875 = vsel %vm378, %v874, %v873
    %v876 = vrot.slane %v826, 2
    %v877 = vsel %vm381, %v876, %v875
    %v878 = vrot.slane %v827, 1
    %v879 = vsel %vm384, %v878, %v877
    %v880 = vsel %vm408, %v857, 0
    %v882 = vsel %vm408, %v879, 0
    %884 = vmatpush.xpose.msra.mxu0 0.0
    %885 = vmatpush.xpose.msra.mxu0 0.0
    %886 = vmatpush.xpose.msra.mxu0 0.0
    %887 = vmatpush.xpose.msra.mxu0 0.0
    %888 = vmatpush.xpose.msra.mxu0 0.0
    %889 = vmatpush.xpose.msra.mxu0 0.0
    %890 = vmatpush.xpose.msra.mxu0 0.0
    %891 = vmatpush.xpose.msra.mxu0 0.0
    %892 = vmatpush.xpose.msra.mxu0 0.0
    %893 = vmatpush.xpose.msra.mxu0 0.0
    %894 = vmatpush.xpose.msra.mxu0 0.0
    %895 = vmatpush.xpose.msra.mxu0 0.0
    %896 = vmatpush.xpose.msra.mxu0 0.0
    %897 = vmatpush.xpose.msra.mxu0 0.0
    %898 = vmatpush.xpose.msra.mxu0 0.0
    %899 = vmatpush.xpose.msra.mxu0 %v882
    %900 = vmatmul.f32.gmra.mxu0 %v880
    %v901 = vpop.f32.mrf.mxu0
    %v902 = vadd.f32 0.0, %v901
    %903 = vdwg.mxu0
    %v904 = vsel %vm408, %v902, -inf
    %905 = vmax.xlane.f32.xlu0 %v904
    %v906 = vpop.xlane.xlu0 %905
    %v907 = vsub.f32 %v902, %v906
    %v908 = vmul.f32 %v907, 1.442695
    %v909 = vpow.pop %v908
    %v910 = vsel %vm408, %v909, 0.0
    %911 = vadd.xlane.f32.xlu0 %v910
    %v912 = vpop.xlane.xlu0 %911
    %v913 = vrcp.pop %v912
    %v914 = vmul.f32 %v909, %v913
    %v923 = vrot.slane %v829, 7
    %v924 = vsel %vm366, %v923, %v828
    %v925 = vrot.slane %v830, 6
    %v926 = vsel %vm369, %v925, %v924
    %v927 = vrot.slane %v831, 5
    %v928 = vsel %vm372, %v927, %v926
    %v929 = vrot.slane %v832, 4
    %v930 = vsel %vm375, %v929, %v928
    %v931 = vrot.slane %v833, 3
    %v932 = vsel %vm378, %v931, %v930
    %v933 = vrot.slane %v834, 2
    %v934 = vsel %vm381, %v933, %v932
    %v935 = vrot.slane %v835, 1
    %v936 = vsel %vm384, %v935, %v934
    %v939 = vsel %vm408, %v914, 0
    %941 = vmatpush.msra.mxu0 0.0
    %942 = vmatpush.msra.mxu0 0.0
    %943 = vmatpush.msra.mxu0 0.0
    %944 = vmatpush.msra.mxu0 0.0
    %945 = vmatpush.msra.mxu0 0.0
    %946 = vmatpush.msra.mxu0 0.0
    %947 = vmatpush.msra.mxu0 0.0
    %948 = vmatpush.msra.mxu0 0.0
    %949 = vmatpush.msra.mxu0 0.0
    %950 = vmatpush.msra.mxu0 0.0
    %951 = vmatpush.msra.mxu0 0.0
    %952 = vmatpush.msra.mxu0 0.0
    %953 = vmatpush.msra.mxu0 0.0
    %954 = vmatpush.msra.mxu0 0.0
    %955 = vmatpush.msra.mxu0 0.0
    %956 = vmatpush.msra.mxu0 %v936
    %957 = vmatmul.f32.gmra.mxu0 %v939
    %v958 = vpop.f32.mrf.mxu0
    %v959 = vadd.f32 0.0, %v958
    %960 = vdwg.mxu0
    %962 = vrot.lane.b32.xlu0 %v645, 8
    %v963 = vpop.permute.xlu0 %962
    %966 = vrot.lane.b32.xlu0 %v802, 16
    %v967 = vpop.permute.xlu0 %966
    %970 = vrot.lane.b32.xlu0 %v959, 24
    %v971 = vpop.permute.xlu0 %970
    %v973 = vsel %vm408, %v488, %v963
    %vm974 = vcmask 130048
    %v975 = vsel %vm974, %v973, %v967
    %vm976 = vcmask 195584
    %v977 = vsel %vm976, %v975, %v971
    %v979 = vrot.slane %v977, 1
    %v980 = vrot.slane %v977, 2
    %v981 = vrot.slane %v977, 3
    %v982 = vrot.slane %v977, 4
    %v983 = vrot.slane %v977, 5
    %v984 = vrot.slane %v977, 6
    %v985 = vrot.slane %v977, 7
    %vm993 = vcmask 253952
    %994 = vst.msk [vmem:[%s3] sm:$0x1] %vm993, %v977
    %995 = vst.msk [vmem:[%s3 + $0x2] sm:$0x1] %vm993, %v979
    %996 = vst.msk [vmem:[%s3 + $0x4] sm:$0x1] %vm993, %v980
    %997 = vst.msk [vmem:[%s3 + $0x6] sm:$0x1] %vm993, %v981
    %998 = vst.msk [vmem:[%s3 + $0x8] sm:$0x1] %vm993, %v982
    %999 = vst.msk [vmem:[%s3 + $0xa] sm:$0x1] %vm993, %v983
    %1000 = vst.msk [vmem:[%s3 + $0xc] sm:$0x1] %vm993, %v984
    %1001 = vst.msk [vmem:[%s3 + $0xe] sm:$0x1] %vm993, %v985
    %s1002 = scalar_lea.vmem [#allocation2], 4
    %v1003 = vld [vmem:[%s1002] sm:$0x1]
    %v1004 = vld [vmem:[%s1002 + $0x8] sm:$0x1]
    %v1005 = vld [vmem:[%s1002 + $0x10] sm:$0x1]
    %v1006 = vld [vmem:[%s1002 + $0x18] sm:$0x1]
    %v1007 = vld [vmem:[%s1002 + $0x20] sm:$0x1]
    %v1008 = vld [vmem:[%s1002 + $0x28] sm:$0x1]
    %v1009 = vld [vmem:[%s1002 + $0x30] sm:$0x1]
    %v1010 = vld [vmem:[%s1002 + $0x38] sm:$0x1]
    %v1011 = vmul.f32 %v1003, 0.35355338
    %v1012 = vmul.f32 %v1004, 0.35355338
    %v1013 = vmul.f32 %v1005, 0.35355338
    %v1014 = vmul.f32 %v1006, 0.35355338
    %v1015 = vmul.f32 %v1007, 0.35355338
    %v1016 = vmul.f32 %v1008, 0.35355338
    %v1017 = vmul.f32 %v1009, 0.35355338
    %v1018 = vmul.f32 %v1010, 0.35355338
    %s1019 = scalar_lea.vmem [#allocation3], 4
    %v1020 = vld [vmem:[%s1019] sm:$0x1]
    %v1021 = vld [vmem:[%s1019 + $0x8] sm:$0x1]
    %v1022 = vld [vmem:[%s1019 + $0x10] sm:$0x1]
    %v1023 = vld [vmem:[%s1019 + $0x18] sm:$0x1]
    %v1024 = vld [vmem:[%s1019 + $0x20] sm:$0x1]
    %v1025 = vld [vmem:[%s1019 + $0x28] sm:$0x1]
    %v1026 = vld [vmem:[%s1019 + $0x30] sm:$0x1]
    %v1027 = vld [vmem:[%s1019 + $0x38] sm:$0x1]
    %s1028 = scalar_lea.vmem [#allocation4], 4
    %v1029 = vld [vmem:[%s1028] sm:$0x1]
    %v1030 = vld [vmem:[%s1028 + $0x8] sm:$0x1]
    %v1031 = vld [vmem:[%s1028 + $0x10] sm:$0x1]
    %v1032 = vld [vmem:[%s1028 + $0x18] sm:$0x1]
    %v1033 = vld [vmem:[%s1028 + $0x20] sm:$0x1]
    %v1034 = vld [vmem:[%s1028 + $0x28] sm:$0x1]
    %v1035 = vld [vmem:[%s1028 + $0x30] sm:$0x1]
    %v1036 = vld [vmem:[%s1028 + $0x38] sm:$0x1]
    %v1045 = vrot.slane %v1012, 7
    %v1046 = vsel %vm366, %v1045, %v1011
    %v1047 = vrot.slane %v1013, 6
    %v1048 = vsel %vm369, %v1047, %v1046
    %v1049 = vrot.slane %v1014, 5
    %v1050 = vsel %vm372, %v1049, %v1048
    %v1051 = vrot.slane %v1015, 4
    %v1052 = vsel %vm375, %v1051, %v1050
    %v1053 = vrot.slane %v1016, 3
    %v1054 = vsel %vm378, %v1053, %v1052
    %v1055 = vrot.slane %v1017, 2
    %v1056 = vsel %vm381, %v1055, %v1054
    %v1057 = vrot.slane %v1018, 1
    %v1058 = vsel %vm384, %v1057, %v1056
    %v1067 = vrot.slane %v1021, 7
    %v1068 = vsel %vm366, %v1067, %v1020
    %v1069 = vrot.slane %v1022, 6
    %v1070 = vsel %vm369, %v1069, %v1068
    %v1071 = vrot.slane %v1023, 5
    %v1072 = vsel %vm372, %v1071, %v1070
    %v1073 = vrot.slane %v1024, 4
    %v1074 = vsel %vm375, %v1073, %v1072
    %v1075 = vrot.slane %v1025, 3
    %v1076 = vsel %vm378, %v1075, %v1074
    %v1077 = vrot.slane %v1026, 2
    %v1078 = vsel %vm381, %v1077, %v1076
    %v1079 = vrot.slane %v1027, 1
    %v1080 = vsel %vm384, %v1079, %v1078
    %v1081 = vsel %vm408, %v1058, 0
    %v1083 = vsel %vm408, %v1080, 0
    %1085 = vmatpush.xpose.msra.mxu0 0.0
    %1086 = vmatpush.xpose.msra.mxu0 0.0
    %1087 = vmatpush.xpose.msra.mxu0 0.0
    %1088 = vmatpush.xpose.msra.mxu0 0.0
    %1089 = vmatpush.xpose.msra.mxu0 0.0
    %1090 = vmatpush.xpose.msra.mxu0 0.0
    %1091 = vmatpush.xpose.msra.mxu0 0.0
    %1092 = vmatpush.xpose.msra.mxu0 0.0
    %1093 = vmatpush.xpose.msra.mxu0 0.0
    %1094 = vmatpush.xpose.msra.mxu0 0.0
    %1095 = vmatpush.xpose.msra.mxu0 0.0
    %1096 = vmatpush.xpose.msra.mxu0 0.0
    %1097 = vmatpush.xpose.msra.mxu0 0.0
    %1098 = vmatpush.xpose.msra.mxu0 0.0
    %1099 = vmatpush.xpose.msra.mxu0 0.0
    %1100 = vmatpush.xpose.msra.mxu0 %v1083
    %1101 = vmatmul.f32.gmra.mxu0 %v1081
    %v1102 = vpop.f32.mrf.mxu0
    %v1103 = vadd.f32 0.0, %v1102
    %1104 = vdwg.mxu0
    %v1105 = vsel %vm408, %v1103, -inf
    %1106 = vmax.xlane.f32.xlu0 %v1105
    %v1107 = vpop.xlane.xlu0 %1106
    %v1108 = vsub.f32 %v1103, %v1107
    %v1109 = vmul.f32 %v1108, 1.442695
    %v1110 = vpow.pop %v1109
    %v1111 = vsel %vm408, %v1110, 0.0
    %1112 = vadd.xlane.f32.xlu0 %v1111
    %v1113 = vpop.xlane.xlu0 %1112
    %v1114 = vrcp.pop %v1113
    %v1115 = vmul.f32 %v1110, %v1114
    %v1124 = vrot.slane %v1030, 7
    %v1125 = vsel %vm366, %v1124, %v1029
    %v1126 = vrot.slane %v1031, 6
    %v1127 = vsel %vm369, %v1126, %v1125
    %v1128 = vrot.slane %v1032, 5
    %v1129 = vsel %vm372, %v1128, %v1127
    %v1130 = vrot.slane %v1033, 4
    %v1131 = vsel %vm375, %v1130, %v1129
    %v1132 = vrot.slane %v1034, 3
    %v1133 = vsel %vm378, %v1132, %v1131
    %v1134 = vrot.slane %v1035, 2
    %v1135 = vsel %vm381, %v1134, %v1133
    %v1136 = vrot.slane %v1036, 1
    %v1137 = vsel %vm384, %v1136, %v1135
    %v1140 = vsel %vm408, %v1115, 0
    %1142 = vmatpush.msra.mxu0 0.0
    %1143 = vmatpush.msra.mxu0 0.0
    %1144 = vmatpush.msra.mxu0 0.0
    %1145 = vmatpush.msra.mxu0 0.0
    %1146 = vmatpush.msra.mxu0 0.0
    %1147 = vmatpush.msra.mxu0 0.0
    %1148 = vmatpush.msra.mxu0 0.0
    %1149 = vmatpush.msra.mxu0 0.0
    %1150 = vmatpush.msra.mxu0 0.0
    %1151 = vmatpush.msra.mxu0 0.0
    %1152 = vmatpush.msra.mxu0 0.0
    %1153 = vmatpush.msra.mxu0 0.0
    %1154 = vmatpush.msra.mxu0 0.0
    %1155 = vmatpush.msra.mxu0 0.0
    %1156 = vmatpush.msra.mxu0 0.0
    %1157 = vmatpush.msra.mxu0 %v1137
    %1158 = vmatmul.f32.gmra.mxu0 %v1140
    %v1159 = vpop.f32.mrf.mxu0
    %v1160 = vadd.f32 0.0, %v1159
    %1161 = vdwg.mxu0
    %v1162 = vld [vmem:[%s1002 + $0x1] sm:$0x1]
    %v1163 = vld [vmem:[%s1002 + $0x9] sm:$0x1]
    %v1164 = vld [vmem:[%s1002 + $0x11] sm:$0x1]
    %v1165 = vld [vmem:[%s1002 + $0x19] sm:$0x1]
    %v1166 = vld [vmem:[%s1002 + $0x21] sm:$0x1]
    %v1167 = vld [vmem:[%s1002 + $0x29] sm:$0x1]
    %v1168 = vld [vmem:[%s1002 + $0x31] sm:$0x1]
    %v1169 = vld [vmem:[%s1002 + $0x39] sm:$0x1]
    %v1170 = vmul.f32 %v1162, 0.35355338
    %v1171 = vmul.f32 %v1163, 0.35355338
    %v1172 = vmul.f32 %v1164, 0.35355338
    %v1173 = vmul.f32 %v1165, 0.35355338
    %v1174 = vmul.f32 %v1166, 0.35355338
    %v1175 = vmul.f32 %v1167, 0.35355338
    %v1176 = vmul.f32 %v1168, 0.35355338
    %v1177 = vmul.f32 %v1169, 0.35355338
    %v1178 = vld [vmem:[%s1019 + $0x1] sm:$0x1]
    %v1179 = vld [vmem:[%s1019 + $0x9] sm:$0x1]
    %v1180 = vld [vmem:[%s1019 + $0x11] sm:$0x1]
    %v1181 = vld [vmem:[%s1019 + $0x19] sm:$0x1]
    %v1182 = vld [vmem:[%s1019 + $0x21] sm:$0x1]
    %v1183 = vld [vmem:[%s1019 + $0x29] sm:$0x1]
    %v1184 = vld [vmem:[%s1019 + $0x31] sm:$0x1]
    %v1185 = vld [vmem:[%s1019 + $0x39] sm:$0x1]
    %v1186 = vld [vmem:[%s1028 + $0x1] sm:$0x1]
    %v1187 = vld [vmem:[%s1028 + $0x9] sm:$0x1]
    %v1188 = vld [vmem:[%s1028 + $0x11] sm:$0x1]
    %v1189 = vld [vmem:[%s1028 + $0x19] sm:$0x1]
    %v1190 = vld [vmem:[%s1028 + $0x21] sm:$0x1]
    %v1191 = vld [vmem:[%s1028 + $0x29] sm:$0x1]
    %v1192 = vld [vmem:[%s1028 + $0x31] sm:$0x1]
    %v1193 = vld [vmem:[%s1028 + $0x39] sm:$0x1]
    %v1202 = vrot.slane %v1171, 7
    %v1203 = vsel %vm366, %v1202, %v1170
    %v1204 = vrot.slane %v1172, 6
    %v1205 = vsel %vm369, %v1204, %v1203
    %v1206 = vrot.slane %v1173, 5
    %v1207 = vsel %vm372, %v1206, %v1205
    %v1208 = vrot.slane %v1174, 4
    %v1209 = vsel %vm375, %v1208, %v1207
    %v1210 = vrot.slane %v1175, 3
    %v1211 = vsel %vm378, %v1210, %v1209
    %v1212 = vrot.slane %v1176, 2
    %v1213 = vsel %vm381, %v1212, %v1211
    %v1214 = vrot.slane %v1177, 1
    %v1215 = vsel %vm384, %v1214, %v1213
    %v1224 = vrot.slane %v1179, 7
    %v1225 = vsel %vm366, %v1224, %v1178
    %v1226 = vrot.slane %v1180, 6
    %v1227 = vsel %vm369, %v1226, %v1225
    %v1228 = vrot.slane %v1181, 5
    %v1229 = vsel %vm372, %v1228, %v1227
    %v1230 = vrot.slane %v1182, 4
    %v1231 = vsel %vm375, %v1230, %v1229
    %v1232 = vrot.slane %v1183, 3
    %v1233 = vsel %vm378, %v1232, %v1231
    %v1234 = vrot.slane %v1184, 2
    %v1235 = vsel %vm381, %v1234, %v1233
    %v1236 = vrot.slane %v1185, 1
    %v1237 = vsel %vm384, %v1236, %v1235
    %v1238 = vsel %vm408, %v1215, 0
    %v1240 = vsel %vm408, %v1237, 0
    %1242 = vmatpush.xpose.msra.mxu0 0.0
    %1243 = vmatpush.xpose.msra.mxu0 0.0
    %1244 = vmatpush.xpose.msra.mxu0 0.0
    %1245 = vmatpush.xpose.msra.mxu0 0.0
    %1246 = vmatpush.xpose.msra.mxu0 0.0
    %1247 = vmatpush.xpose.msra.mxu0 0.0
    %1248 = vmatpush.xpose.msra.mxu0 0.0
    %1249 = vmatpush.xpose.msra.mxu0 0.0
    %1250 = vmatpush.xpose.msra.mxu0 0.0
    %1251 = vmatpush.xpose.msra.mxu0 0.0
    %1252 = vmatpush.xpose.msra.mxu0 0.0
    %1253 = vmatpush.xpose.msra.mxu0 0.0
    %1254 = vmatpush.xpose.msra.mxu0 0.0
    %1255 = vmatpush.xpose.msra.mxu0 0.0
    %1256 = vmatpush.xpose.msra.mxu0 0.0
    %1257 = vmatpush.xpose.msra.mxu0 %v1240
    %1258 = vmatmul.f32.gmra.mxu0 %v1238
    %v1259 = vpop.f32.mrf.mxu0
    %v1260 = vadd.f32 0.0, %v1259
    %1261 = vdwg.mxu0
    %v1262 = vsel %vm408, %v1260, -inf
    %1263 = vmax.xlane.f32.xlu0 %v1262
    %v1264 = vpop.xlane.xlu0 %1263
    %v1265 = vsub.f32 %v1260, %v1264
    %v1266 = vmul.f32 %v1265, 1.442695
    %v1267 = vpow.pop %v1266
    %v1268 = vsel %vm408, %v1267, 0.0
    %1269 = vadd.xlane.f32.xlu0 %v1268
    %v1270 = vpop.xlane.xlu0 %1269
    %v1271 = vrcp.pop %v1270
    %v1272 = vmul.f32 %v1267, %v1271
    %v1281 = vrot.slane %v1187, 7
    %v1282 = vsel %vm366, %v1281, %v1186
    %v1283 = vrot.slane %v1188, 6
    %v1284 = vsel %vm369, %v1283, %v1282
    %v1285 = vrot.slane %v1189, 5
    %v1286 = vsel %vm372, %v1285, %v1284
    %v1287 = vrot.slane %v1190, 4
    %v1288 = vsel %vm375, %v1287, %v1286
    %v1289 = vrot.slane %v1191, 3
    %v1290 = vsel %vm378, %v1289, %v1288
    %v1291 = vrot.slane %v1192, 2
    %v1292 = vsel %vm381, %v1291, %v1290
    %v1293 = vrot.slane %v1193, 1
    %v1294 = vsel %vm384, %v1293, %v1292
    %v1297 = vsel %vm408, %v1272, 0
    %1299 = vmatpush.msra.mxu0 0.0
    %1300 = vmatpush.msra.mxu0 0.0
    %1301 = vmatpush.msra.mxu0 0.0
    %1302 = vmatpush.msra.mxu0 0.0
    %1303 = vmatpush.msra.mxu0 0.0
    %1304 = vmatpush.msra.mxu0 0.0
    %1305 = vmatpush.msra.mxu0 0.0
    %1306 = vmatpush.msra.mxu0 0.0
    %1307 = vmatpush.msra.mxu0 0.0
    %1308 = vmatpush.msra.mxu0 0.0
    %1309 = vmatpush.msra.mxu0 0.0
    %1310 = vmatpush.msra.mxu0 0.0
    %1311 = vmatpush.msra.mxu0 0.0
    %1312 = vmatpush.msra.mxu0 0.0
    %1313 = vmatpush.msra.mxu0 0.0
    %1314 = vmatpush.msra.mxu0 %v1294
    %1315 = vmatmul.f32.gmra.mxu0 %v1297
    %v1316 = vpop.f32.mrf.mxu0
    %v1317 = vadd.f32 0.0, %v1316
    %1318 = vdwg.mxu0
    %v1319 = vld [vmem:[%s1002 + $0x2] sm:$0x1]
    %v1320 = vld [vmem:[%s1002 + $0xa] sm:$0x1]
    %v1321 = vld [vmem:[%s1002 + $0x12] sm:$0x1]
    %v1322 = vld [vmem:[%s1002 + $0x1a] sm:$0x1]
    %v1323 = vld [vmem:[%s1002 + $0x22] sm:$0x1]
    %v1324 = vld [vmem:[%s1002 + $0x2a] sm:$0x1]
    %v1325 = vld [vmem:[%s1002 + $0x32] sm:$0x1]
    %v1326 = vld [vmem:[%s1002 + $0x3a] sm:$0x1]
    %v1327 = vmul.f32 %v1319, 0.35355338
    %v1328 = vmul.f32 %v1320, 0.35355338
    %v1329 = vmul.f32 %v1321, 0.35355338
    %v1330 = vmul.f32 %v1322, 0.35355338
    %v1331 = vmul.f32 %v1323, 0.35355338
    %v1332 = vmul.f32 %v1324, 0.35355338
    %v1333 = vmul.f32 %v1325, 0.35355338
    %v1334 = vmul.f32 %v1326, 0.35355338
    %v1335 = vld [vmem:[%s1019 + $0x2] sm:$0x1]
    %v1336 = vld [vmem:[%s1019 + $0xa] sm:$0x1]
    %v1337 = vld [vmem:[%s1019 + $0x12] sm:$0x1]
    %v1338 = vld [vmem:[%s1019 + $0x1a] sm:$0x1]
    %v1339 = vld [vmem:[%s1019 + $0x22] sm:$0x1]
    %v1340 = vld [vmem:[%s1019 + $0x2a] sm:$0x1]
    %v1341 = vld [vmem:[%s1019 + $0x32] sm:$0x1]
    %v1342 = vld [vmem:[%s1019 + $0x3a] sm:$0x1]
    %v1343 = vld [vmem:[%s1028 + $0x2] sm:$0x1]
    %v1344 = vld [vmem:[%s1028 + $0xa] sm:$0x1]
    %v1345 = vld [vmem:[%s1028 + $0x12] sm:$0x1]
    %v1346 = vld [vmem:[%s1028 + $0x1a] sm:$0x1]
    %v1347 = vld [vmem:[%s1028 + $0x22] sm:$0x1]
    %v1348 = vld [vmem:[%s1028 + $0x2a] sm:$0x1]
    %v1349 = vld [vmem:[%s1028 + $0x32] sm:$0x1]
    %v1350 = vld [vmem:[%s1028 + $0x3a] sm:$0x1]
    %v1359 = vrot.slane %v1328, 7
    %v1360 = vsel %vm366, %v1359, %v1327
    %v1361 = vrot.slane %v1329, 6
    %v1362 = vsel %vm369, %v1361, %v1360
    %v1363 = vrot.slane %v1330, 5
    %v1364 = vsel %vm372, %v1363, %v1362
    %v1365 = vrot.slane %v1331, 4
    %v1366 = vsel %vm375, %v1365, %v1364
    %v1367 = vrot.slane %v1332, 3
    %v1368 = vsel %vm378, %v1367, %v1366
    %v1369 = vrot.slane %v1333, 2
    %v1370 = vsel %vm381, %v1369, %v1368
    %v1371 = vrot.slane %v1334, 1
    %v1372 = vsel %vm384, %v1371, %v1370
    %v1381 = vrot.slane %v1336, 7
    %v1382 = vsel %vm366, %v1381, %v1335
    %v1383 = vrot.slane %v1337, 6
    %v1384 = vsel %vm369, %v1383, %v1382
    %v1385 = vrot.slane %v1338, 5
    %v1386 = vsel %vm372, %v1385, %v1384
    %v1387 = vrot.slane %v1339, 4
    %v1388 = vsel %vm375, %v1387, %v1386
    %v1389 = vrot.slane %v1340, 3
    %v1390 = vsel %vm378, %v1389, %v1388
    %v1391 = vrot.slane %v1341, 2
    %v1392 = vsel %vm381, %v1391, %v1390
    %v1393 = vrot.slane %v1342, 1
    %v1394 = vsel %vm384, %v1393, %v1392
    %v1395 = vsel %vm408, %v1372, 0
    %v1397 = vsel %vm408, %v1394, 0
    %1399 = vmatpush.xpose.msra.mxu0 0.0
    %1400 = vmatpush.xpose.msra.mxu0 0.0
    %1401 = vmatpush.xpose.msra.mxu0 0.0
    %1402 = vmatpush.xpose.msra.mxu0 0.0
    %1403 = vmatpush.xpose.msra.mxu0 0.0
    %1404 = vmatpush.xpose.msra.mxu0 0.0
    %1405 = vmatpush.xpose.msra.mxu0 0.0
    %1406 = vmatpush.xpose.msra.mxu0 0.0
    %1407 = vmatpush.xpose.msra.mxu0 0.0
    %1408 = vmatpush.xpose.msra.mxu0 0.0
    %1409 = vmatpush.xpose.msra.mxu0 0.0
    %1410 = vmatpush.xpose.msra.mxu0 0.0
    %1411 = vmatpush.xpose.msra.mxu0 0.0
    %1412 = vmatpush.xpose.msra.mxu0 0.0
    %1413 = vmatpush.xpose.msra.mxu0 0.0
    %1414 = vmatpush.xpose.msra.mxu0 %v1397
    %1415 = vmatmul.f32.gmra.mxu0 %v1395
    %v1416 = vpop.f32.mrf.mxu0
    %v1417 = vadd.f32 0.0, %v1416
    %1418 = vdwg.mxu0
    %v1419 = vsel %vm408, %v1417, -inf
    %1420 = vmax.xlane.f32.xlu0 %v1419
    %v1421 = vpop.xlane.xlu0 %1420
    %v1422 = vsub.f32 %v1417, %v1421
    %v1423 = vmul.f32 %v1422, 1.442695
    %v1424 = vpow.pop %v1423
    %v1425 = vsel %vm408, %v1424, 0.0
    %1426 = vadd.xlane.f32.xlu0 %v1425
    %v1427 = vpop.xlane.xlu0 %1426
    %v1428 = vrcp.pop %v1427
    %v1429 = vmul.f32 %v1424, %v1428
    %v1438 = vrot.slane %v1344, 7
    %v1439 = vsel %vm366, %v1438, %v1343
    %v1440 = vrot.slane %v1345, 6
    %v1441 = vsel %vm369, %v1440, %v1439
    %v1442 = vrot.slane %v1346, 5
    %v1443 = vsel %vm372, %v1442, %v1441
    %v1444 = vrot.slane %v1347, 4
    %v1445 = vsel %vm375, %v1444, %v1443
    %v1446 = vrot.slane %v1348, 3
    %v1447 = vsel %vm378, %v1446, %v1445
    %v1448 = vrot.slane %v1349, 2
    %v1449 = vsel %vm381, %v1448, %v1447
    %v1450 = vrot.slane %v1350, 1
    %v1451 = vsel %vm384, %v1450, %v1449
    %v1454 = vsel %vm408, %v1429, 0
    %1456 = vmatpush.msra.mxu0 0.0
    %1457 = vmatpush.msra.mxu0 0.0
    %1458 = vmatpush.msra.mxu0 0.0
    %1459 = vmatpush.msra.mxu0 0.0
    %1460 = vmatpush.msra.mxu0 0.0
    %1461 = vmatpush.msra.mxu0 0.0
    %1462 = vmatpush.msra.mxu0 0.0
    %1463 = vmatpush.msra.mxu0 0.0
    %1464 = vmatpush.msra.mxu0 0.0
    %1465 = vmatpush.msra.mxu0 0.0
    %1466 = vmatpush.msra.mxu0 0.0
    %1467 = vmatpush.msra.mxu0 0.0
    %1468 = vmatpush.msra.mxu0 0.0
    %1469 = vmatpush.msra.mxu0 0.0
    %1470 = vmatpush.msra.mxu0 0.0
    %1471 = vmatpush.msra.mxu0 %v1451
    %1472 = vmatmul.f32.gmra.mxu0 %v1454
    %v1473 = vpop.f32.mrf.mxu0
    %v1474 = vadd.f32 0.0, %v1473
    %1475 = vdwg.mxu0
    %v1476 = vld [vmem:[%s1002 + $0x3] sm:$0x1]
    %v1477 = vld [vmem:[%s1002 + $0xb] sm:$0x1]
    %v1478 = vld [vmem:[%s1002 + $0x13] sm:$0x1]
    %v1479 = vld [vmem:[%s1002 + $0x1b] sm:$0x1]
    %v1480 = vld [vmem:[%s1002 + $0x23] sm:$0x1]
    %v1481 = vld [vmem:[%s1002 + $0x2b] sm:$0x1]
    %v1482 = vld [vmem:[%s1002 + $0x33] sm:$0x1]
    %v1483 = vld [vmem:[%s1002 + $0x3b] sm:$0x1]
    %v1484 = vmul.f32 %v1476, 0.35355338
    %v1485 = vmul.f32 %v1477, 0.35355338
    %v1486 = vmul.f32 %v1478, 0.35355338
    %v1487 = vmul.f32 %v1479, 0.35355338
    %v1488 = vmul.f32 %v1480, 0.35355338
    %v1489 = vmul.f32 %v1481, 0.35355338
    %v1490 = vmul.f32 %v1482, 0.35355338
    %v1491 = vmul.f32 %v1483, 0.35355338
    %v1492 = vld [vmem:[%s1019 + $0x3] sm:$0x1]
    %v1493 = vld [vmem:[%s1019 + $0xb] sm:$0x1]
    %v1494 = vld [vmem:[%s1019 + $0x13] sm:$0x1]
    %v1495 = vld [vmem:[%s1019 + $0x1b] sm:$0x1]
    %v1496 = vld [vmem:[%s1019 + $0x23] sm:$0x1]
    %v1497 = vld [vmem:[%s1019 + $0x2b] sm:$0x1]
    %v1498 = vld [vmem:[%s1019 + $0x33] sm:$0x1]
    %v1499 = vld [vmem:[%s1019 + $0x3b] sm:$0x1]
    %v1500 = vld [vmem:[%s1028 + $0x3] sm:$0x1]
    %v1501 = vld [vmem:[%s1028 + $0xb] sm:$0x1]
    %v1502 = vld [vmem:[%s1028 + $0x13] sm:$0x1]
    %v1503 = vld [vmem:[%s1028 + $0x1b] sm:$0x1]
    %v1504 = vld [vmem:[%s1028 + $0x23] sm:$0x1]
    %v1505 = vld [vmem:[%s1028 + $0x2b] sm:$0x1]
    %v1506 = vld [vmem:[%s1028 + $0x33] sm:$0x1]
    %v1507 = vld [vmem:[%s1028 + $0x3b] sm:$0x1]
    %v1516 = vrot.slane %v1485, 7
    %v1517 = vsel %vm366, %v1516, %v1484
    %v1518 = vrot.slane %v1486, 6
    %v1519 = vsel %vm369, %v1518, %v1517
    %v1520 = vrot.slane %v1487, 5
    %v1521 = vsel %vm372, %v1520, %v1519
    %v1522 = vrot.slane %v1488, 4
    %v1523 = vsel %vm375, %v1522, %v1521
    %v1524 = vrot.slane %v1489, 3
    %v1525 = vsel %vm378, %v1524, %v1523
    %v1526 = vrot.slane %v1490, 2
    %v1527 = vsel %vm381, %v1526, %v1525
    %v1528 = vrot.slane %v1491, 1
    %v1529 = vsel %vm384, %v1528, %v1527
    %v1538 = vrot.slane %v1493, 7
    %v1539 = vsel %vm366, %v1538, %v1492
    %v1540 = vrot.slane %v1494, 6
    %v1541 = vsel %vm369, %v1540, %v1539
    %v1542 = vrot.slane %v1495, 5
    %v1543 = vsel %vm372, %v1542, %v1541
    %v1544 = vrot.slane %v1496, 4
    %v1545 = vsel %vm375, %v1544, %v1543
    %v1546 = vrot.slane %v1497, 3
    %v1547 = vsel %vm378, %v1546, %v1545
    %v1548 = vrot.slane %v1498, 2
    %v1549 = vsel %vm381, %v1548, %v1547
    %v1550 = vrot.slane %v1499, 1
    %v1551 = vsel %vm384, %v1550, %v1549
    %v1552 = vsel %vm408, %v1529, 0
    %v1554 = vsel %vm408, %v1551, 0
    %1556 = vmatpush.xpose.msra.mxu0 0.0
    %1557 = vmatpush.xpose.msra.mxu0 0.0
    %1558 = vmatpush.xpose.msra.mxu0 0.0
    %1559 = vmatpush.xpose.msra.mxu0 0.0
    %1560 = vmatpush.xpose.msra.mxu0 0.0
    %1561 = vmatpush.xpose.msra.mxu0 0.0
    %1562 = vmatpush.xpose.msra.mxu0 0.0
    %1563 = vmatpush.xpose.msra.mxu0 0.0
    %1564 = vmatpush.xpose.msra.mxu0 0.0
    %1565 = vmatpush.xpose.msra.mxu0 0.0
    %1566 = vmatpush.xpose.msra.mxu0 0.0
    %1567 = vmatpush.xpose.msra.mxu0 0.0
    %1568 = vmatpush.xpose.msra.mxu0 0.0
    %1569 = vmatpush.xpose.msra.mxu0 0.0
    %1570 = vmatpush.xpose.msra.mxu0 0.0
    %1571 = vmatpush.xpose.msra.mxu0 %v1554
    %1572 = vmatmul.f32.gmra.mxu0 %v1552
    %v1573 = vpop.f32.mrf.mxu0
    %v1574 = vadd.f32 0.0, %v1573
    %1575 = vdwg.mxu0
    %v1576 = vsel %vm408, %v1574, -inf
    %1577 = vmax.xlane.f32.xlu0 %v1576
    %v1578 = vpop.xlane.xlu0 %1577
    %v1579 = vsub.f32 %v1574, %v1578
    %v1580 = vmul.f32 %v1579, 1.442695
    %v1581 = vpow.pop %v1580
    %v1582 = vsel %vm408, %v1581, 0.0
    %1583 = vadd.xlane.f32.xlu0 %v1582
    %v1584 = vpop.xlane.xlu0 %1583
    %v1585 = vrcp.pop %v1584
    %v1586 = vmul.f32 %v1581, %v1585
    %v1595 = vrot.slane %v1501, 7
    %v1596 = vsel %vm366, %v1595, %v1500
    %v1597 = vrot.slane %v1502, 6
    %v1598 = vsel %vm369, %v1597, %v1596
    %v1599 = vrot.slane %v1503, 5
    %v1600 = vsel %vm372, %v1599, %v1598
    %v1601 = vrot.slane %v1504, 4
    %v1602 = vsel %vm375, %v1601, %v1600
    %v1603 = vrot.slane %v1505, 3
    %v1604 = vsel %vm378, %v1603, %v1602
    %v1605 = vrot.slane %v1506, 2
    %v1606 = vsel %vm381, %v1605, %v1604
    %v1607 = vrot.slane %v1507, 1
    %v1608 = vsel %vm384, %v1607, %v1606
    %v1611 = vsel %vm408, %v1586, 0
    %1613 = vmatpush.msra.mxu0 0.0
    %1614 = vmatpush.msra.mxu0 0.0
    %1615 = vmatpush.msra.mxu0 0.0
    %1616 = vmatpush.msra.mxu0 0.0
    %1617 = vmatpush.msra.mxu0 0.0
    %1618 = vmatpush.msra.mxu0 0.0
    %1619 = vmatpush.msra.mxu0 0.0
    %1620 = vmatpush.msra.mxu0 0.0
    %1621 = vmatpush.msra.mxu0 0.0
    %1622 = vmatpush.msra.mxu0 0.0
    %1623 = vmatpush.msra.mxu0 0.0
    %1624 = vmatpush.msra.mxu0 0.0
    %1625 = vmatpush.msra.mxu0 0.0
    %1626 = vmatpush.msra.mxu0 0.0
    %1627 = vmatpush.msra.mxu0 0.0
    %1628 = vmatpush.msra.mxu0 %v1608
    %1629 = vmatmul.f32.gmra.mxu0 %v1611
    %v1630 = vpop.f32.mrf.mxu0
    %v1631 = vadd.f32 0.0, %v1630
    %1632 = vdwg.mxu0
    %1634 = vrot.lane.b32.xlu0 %v1317, 8
    %v1635 = vpop.permute.xlu0 %1634
    %1638 = vrot.lane.b32.xlu0 %v1474, 16
    %v1639 = vpop.permute.xlu0 %1638
    %1642 = vrot.lane.b32.xlu0 %v1631, 24
    %v1643 = vpop.permute.xlu0 %1642
    %v1645 = vsel %vm408, %v1160, %v1635
    %v1646 = vsel %vm974, %v1645, %v1639
    %v1647 = vsel %vm976, %v1646, %v1643
    %v1649 = vrot.slane %v1647, 1
    %v1650 = vrot.slane %v1647, 2
    %v1651 = vrot.slane %v1647, 3
    %v1652 = vrot.slane %v1647, 4
    %v1653 = vrot.slane %v1647, 5
    %v1654 = vrot.slane %v1647, 6
    %v1655 = vrot.slane %v1647, 7
    %1663 = vst.msk [vmem:[%s3 + $0x1] sm:$0x1] %vm993, %v1647
    %1664 = vst.msk [vmem:[%s3 + $0x3] sm:$0x1] %vm993, %v1649
    %1665 = vst.msk [vmem:[%s3 + $0x5] sm:$0x1] %vm993, %v1650
    %1666 = vst.msk [vmem:[%s3 + $0x7] sm:$0x1] %vm993, %v1651
    %1667 = vst.msk [vmem:[%s3 + $0x9] sm:$0x1] %vm993, %v1652
    %1668 = vst.msk [vmem:[%s3 + $0xb] sm:$0x1] %vm993, %v1653
    %1669 = vst.msk [vmem:[%s3 + $0xd] sm:$0x1] %vm993, %v1654
    %1670 = vst.msk [vmem:[%s3 + $0xf] sm:$0x1] %vm993, %v1655
    // Predicated region
    $region137: #{memory_augmented_ctr_forward.6} parent=1 // pred_check
      _
    $region138: #{memory_augmented_ctr_forward.6} parent=1 // pred_check_branch
      %1672 = sbr.rel (0) target = $region140
    $region139: #{memory_augmented_ctr_forward.6} parent=1 // pred_region
      _
    $region140: #{memory_augmented_ctr_forward.6} parent=1 // pred_fallthru
      _
    // Predicated region
    $region141: #{memory_augmented_ctr_forward.6} parent=1 // pred_check
      _
    $region142: #{memory_augmented_ctr_forward.6} parent=1 // pred_check_branch
      %1674 = sbr.rel (0) target = $region144
    $region143: #{memory_augmented_ctr_forward.6} parent=1 // pred_region
      _
    $region144: #{memory_augmented_ctr_forward.6} parent=1 // pred_fallthru
      _

</llo_original>
